<compile_context>
chip_gen: v7x
topology: tpu7x:2x2x1
jax: 0.10.0
libtpu: 0.0.40
codegen_flags: <defaults>
</compile_context>

<pallas_src>
import functools

import jax
import jax.numpy as jnp
from jax.experimental import pallas as pl
from jax.experimental.pallas import tpu as pltpu

HP = 128  # padded feature / hidden / output lane width


# ----------------------------------------------------------------------------
# Pallas kernel: full Net.forward, grid = (layer, dst-row-tile)
# ----------------------------------------------------------------------------
def net_kernel(x_ref, ahat_ref, add_ref, wc_ref, pool_ref, wl1_ref, wl2_ref,
               bl_ref, out_ref, h_ref, msg_ref):
    l = pl.program_id(0)
    i = pl.program_id(1)
    n_tiles = pl.num_programs(1)
    tn = ahat_ref.shape[0]

    # First grid step: seed the persistent activation buffer with the input x.
    @pl.when(jnp.logical_and(l == 0, i == 0))
    def _():
        h_ref[...] = x_ref[...]

    # Once per layer: full pre-message  msg = h @ W2x  (kept VMEM-resident so
    # every streamed A_hat row tile can reuse it).
    @pl.when(i == 0)
    def _():
        msg_ref[...] = jnp.dot(
            h_ref[...], wc_ref[:, HP:],
            preferred_element_type=jnp.float32).astype(jnp.bfloat16)

    # Per-row-tile update:
    #   h_out = relu( h @ W1  +  A_hat_tile @ msg  +  (ea_agg @ W2e + b1) )
    row0 = pl.multiple_of(i * tn, 128)
    h_tile = h_ref[pl.ds(row0, tn), :]
    center = jnp.dot(h_tile, wc_ref[:, :HP], preferred_element_type=jnp.float32)
    aggr = jnp.dot(ahat_ref[...], msg_ref[...],
                   preferred_element_type=jnp.float32)
    # TODO(synk): training-mode dropout (p=0.5) not implemented (inference identity).
    h_ref[pl.ds(row0, tn), :] = jnp.maximum(
        center + aggr + add_ref[...], 0.0).astype(jnp.bfloat16)

    # Final grid step: per-graph mean pool -> lin1 -> relu -> lin2.
    @pl.when(jnp.logical_and(l == pl.num_programs(0) - 1, i == n_tiles - 1))
    def _():
        g = jnp.dot(pool_ref[...], h_ref[...],
                    preferred_element_type=jnp.float32)
        g = jnp.maximum(
            jnp.dot(g.astype(jnp.bfloat16), wl1_ref[...],
                    preferred_element_type=jnp.float32) + bl_ref[0:1, :], 0.0)
        out_ref[...] = jnp.dot(g.astype(jnp.bfloat16), wl2_ref[...],
                               preferred_element_type=jnp.float32) + bl_ref[1:2, :]


# ----------------------------------------------------------------------------
# Host-side fusion of message passing + padding / packing (built directly at
# padded shapes, single cast each).
# ----------------------------------------------------------------------------
def _round_up(n, m):
    return ((n + m - 1) // m) * m


def _pad2(a, rows, cols):
    return jnp.pad(a, ((0, rows - a.shape[0]), (0, cols - a.shape[1])))


def build_operators(edge_attr, src, dst, batch_vec, num_nodes, num_graphs,
                    NP, BP):
    deg = jnp.zeros((num_nodes,), jnp.float32).at[src].add(1.0)
    dis = jnp.where(deg > 0, deg ** -0.5, 0.0)
    norm = dis[src] * dis[dst]                                         # (E,)
    indeg = jnp.maximum(
        jnp.zeros((num_nodes,), jnp.float32).at[dst].add(1.0), 1.0)
    inv_indeg = 1.0 / indeg

    # A_hat = S_mean . diag(norm) . G_src, scattered straight into (NP, NP).
    a_hat = (jnp.zeros((NP, NP), jnp.float32)
             .at[dst, src].add(norm * inv_indeg[dst])).astype(jnp.bfloat16)

    # ea_agg = S_mean . (norm * edge_attr) : (N, Fe)  (tiny, stays f32)
    ea_agg = (jnp.zeros((num_nodes, edge_attr.shape[1]), jnp.float32)
              .at[dst].add(norm[:, None] * edge_attr)) * inv_indeg[:, None]

    # per-graph mean pooling operator, built straight into (BP, NP) bf16.
    cnt = jnp.maximum(
        jnp.zeros((num_graphs,), jnp.float32).at[batch_vec].add(1.0), 1.0)
    pool = (jnp.zeros((BP, NP), jnp.float32)
            .at[batch_vec, jnp.arange(num_nodes)]
            .set(1.0 / cnt[batch_vec])).astype(jnp.bfloat16)
    return a_hat, ea_agg, pool


def net_forward(params, x, edge_attr, src, dst, batch_vec,
                num_nodes, num_graphs):
    NP = _round_up(num_nodes, 128)
    BP = _round_up(max(num_graphs, 8), 8)
    for cand in (512, 384, 256, 128):          # A_hat row-tile height
        if NP % cand == 0:
            TN = cand
            break
    NT = NP // TN

    a_hat, ea_agg, pool = build_operators(edge_attr, src, dst, batch_vec,
                                          num_nodes, num_graphs, NP, BP)

    bf = jnp.bfloat16
    xp = jnp.zeros((NP, HP), bf).at[:num_nodes, :x.shape[1]].set(x.astype(bf))

    # Hoisted h-independent additive term per conv layer:
    #   add_l = ea_agg @ W2e_l + b1_l  (bias zeroed on pad rows).
    def make_add(w2e, b1):
        t = ea_agg @ w2e + b1                          # (N, out) f32
        return jnp.zeros((NP, HP), jnp.float32).at[:num_nodes, :t.shape[1]].set(t)

    add_stack = jnp.stack([make_add(params["w2a_e"], params["b1a"]),
                           make_add(params["w2b_e"], params["b1b"])], axis=0)

    # Fused per-conv weights: concat(lin1.W, lin2.W_x) along the output dim.
    def make_wc(w1, w2x):
        return jnp.concatenate([_pad2(w1, HP, HP), _pad2(w2x, HP, HP)],
                               axis=1).astype(bf)

    wc_stack = jnp.stack([make_wc(params["w1a"], params["w2a_x"]),
                          make_wc(params["w1b"], params["w2b_x"])], axis=0)
    wl1 = _pad2(params["wl1"], HP, HP).astype(bf)
    wl2 = _pad2(params["wl2"], HP, HP).astype(bf)
    bl = jnp.concatenate([_pad2(params["bl1"], 1, HP),
                          _pad2(params["bl2"], 1, HP),
                          jnp.zeros((6, HP), jnp.float32)], axis=0)  # (8, HP)

    # VMEM budget from the actual footprint (double-buffered operands + scratch).
    fp = (2 * TN * NP * 2          # streamed A_hat row tiles
          + 2 * NP * HP * 2        # x
          + 2 * TN * HP * 4        # add tiles (f32)
          + 2 * HP * 2 * HP * 2    # fused conv weights
          + 2 * BP * NP * 2        # pool
          + 2 * 2 * HP * HP * 2    # wl1 + wl2
          + 2 * 8 * HP * 4         # packed head biases
          + 2 * BP * HP * 4        # output block
          + 2 * NP * HP * 2        # h_cur + pre_msg scratch
          + 8 * TN * HP * 4)       # f32 elementwise temporaries
    vmem_limit = int(min(max(2 * fp, 16 << 20), 48 << 20))

    flops = 2 * (2 * NP * NP * HP          # two A_hat aggregations
                 + 2 * NP * HP * 2 * HP    # two fused center/message transforms
                 + BP * NP * HP            # pooling
                 + 2 * BP * HP * HP)       # lin1, lin2
    bytes_accessed = (2 * NP * NP * 2 + NP * HP * 2 + 2 * NP * HP * 4
                      + 2 * HP * 2 * HP * 2 + BP * NP * 2 + 2 * HP * HP * 2
                      + 8 * HP * 4 + BP * HP * 4)

    grid_spec = pltpu.PrefetchScalarGridSpec(
        num_scalar_prefetch=0,
        grid=(2, NT),                                   # (conv layer, dst row tile)
        in_specs=[
            pl.BlockSpec((NP, HP), lambda l, i: (0, 0)),          # x
            pl.BlockSpec((TN, NP), lambda l, i: (i, 0)),          # A_hat row tile
            pl.BlockSpec((None, TN, HP), lambda l, i: (l, i, 0)), # add term tile
            pl.BlockSpec((None, HP, 2 * HP), lambda l, i: (l, 0, 0)),  # fused conv W
            pl.BlockSpec((BP, NP), lambda l, i: (0, 0)),          # pool
            pl.BlockSpec((HP, HP), lambda l, i: (0, 0)),          # wl1
            pl.BlockSpec((HP, HP), lambda l, i: (0, 0)),          # wl2
            pl.BlockSpec((8, HP), lambda l, i: (0, 0)),           # packed biases
        ],
        out_specs=pl.BlockSpec((BP, HP), lambda l, i: (0, 0)),
        scratch_shapes=[pltpu.VMEM((NP, HP), jnp.bfloat16),       # activations
                        pltpu.VMEM((NP, HP), jnp.bfloat16)],      # pre-message
    )

    # TODO(synk): on v7x a leading "parallel" axis over block-diagonal graph
    # groups would use the second TensorCore; single-core here.
    out_p = pl.pallas_call(
        net_kernel,
        out_shape=jax.ShapeDtypeStruct((BP, HP), jnp.float32),
        grid_spec=grid_spec,
        compiler_params=pltpu.CompilerParams(
            dimension_semantics=("arbitrary", "arbitrary"),
            vmem_limit_bytes=vmem_limit),
        cost_estimate=pl.CostEstimate(flops=flops, transcendentals=0,
                                      bytes_accessed=bytes_accessed),
    )(xp, a_hat, add_stack, wc_stack, pool, wl1, wl2, bl)
    return out_p[:num_graphs, :2]


# ----------------------------------------------------------------------------
# Pure-JAX f32 reference (independent gather/segment formulation)
# ----------------------------------------------------------------------------
def ref_forward(params, x, edge_attr, src, dst, batch_vec, num_nodes, num_graphs):
    deg = jnp.zeros((num_nodes,), jnp.float32).at[src].add(1.0)
    dis = jnp.where(deg > 0, deg ** -0.5, 0.0)
    norm = (dis[src] * dis[dst])[:, None]
    indeg = jnp.maximum(jnp.zeros((num_nodes,), jnp.float32).at[dst].add(1.0), 1.0)

    def conv(h, w1, b1, w2x, w2e):
        center = h @ w1 + b1
        msg = (h[src] @ w2x + edge_attr @ w2e) * norm
        aggr = jnp.zeros((num_nodes, w1.shape[1]), jnp.float32).at[dst].add(msg)
        aggr = aggr / indeg[:, None]
        return center + aggr

    h = jax.nn.relu(conv(x, params["w1a"], params["b1a"],
                         params["w2a_x"], params["w2a_e"]))
    h = jax.nn.relu(conv(h, params["w1b"], params["b1b"],
                         params["w2b_x"], params["w2b_e"]))
    cnt = jnp.maximum(
        jnp.zeros((num_graphs,), jnp.float32).at[batch_vec].add(1.0), 1.0)
    g = jnp.zeros((num_graphs, h.shape[1]), jnp.float32).at[batch_vec].add(h)
    g = g / cnt[:, None]
    g = jax.nn.relu(g @ params["wl1"] + params["bl1"])
    return g @ params["wl2"] + params["bl2"]


# ----------------------------------------------------------------------------
# Params / example setup
# ----------------------------------------------------------------------------
def make_params(key):
    ks = jax.random.split(key, 10)
    scale = 0.1
    return {
        # conv1: MyGCNConv(3, 16, 2)
        "w1a": scale * jax.random.normal(ks[0], (3, 16), jnp.float32),
        "b1a": scale * jax.random.normal(ks[1], (1, 16), jnp.float32),
        "w2a_x": scale * jax.random.normal(ks[2], (3, 16), jnp.float32),
        "w2a_e": scale * jax.random.normal(ks[3], (2, 16), jnp.float32),
        # conv2: MyGCNConv(16, 16, 2)
        "w1b": scale * jax.random.normal(ks[4], (16, 16), jnp.float32),
        "b1b": scale * jax.random.normal(ks[5], (1, 16), jnp.float32),
        "w2b_x": scale * jax.random.normal(ks[6], (16, 16), jnp.float32),
        "w2b_e": scale * jax.random.normal(ks[7], (2, 16), jnp.float32),
        # lin1: Linear(16, 16), lin2: Linear(16, 2)
        "wl1": scale * jax.random.normal(ks[8], (16, 16), jnp.float32),
        "bl1": jnp.zeros((1, 16), jnp.float32),
        "wl2": scale * jax.random.normal(ks[9], (16, 2), jnp.float32),
        "bl2": jnp.zeros((1, 2), jnp.float32),
    }


if __name__ == "__main__":
    key = jax.random.PRNGKey(0)
    k_param, k_x, k_ea = jax.random.split(key, 3)

    # Small synthetic batch of 2 graphs, 8 nodes each, bidirectional ring edges.
    num_graphs = 2
    nodes_per_graph = 8
    num_nodes = num_graphs * nodes_per_graph

    src_list, dst_list = [], []
    for g in range(num_graphs):
        base = g * nodes_per_graph
        for i in range(nodes_per_graph):
            a = base + i
            b = base + (i + 1) % nodes_per_graph
            src_list += [a, b]
            dst_list += [b, a]
    src = jnp.array(src_list, dtype=jnp.int32)
    dst = jnp.array(dst_list, dtype=jnp.int32)
    num_edges = src.shape[0]  # 32
    batch_vec = jnp.array(
        sum(([g] * nodes_per_graph for g in range(num_graphs)), []), dtype=jnp.int32)

    x = jax.random.normal(k_x, (num_nodes, 3), jnp.float32)          # batch.x
    edge_attr = jax.random.normal(k_ea, (num_edges, 2), jnp.float32) # batch.edge_attr
    params = make_params(k_param)

    fwd = jax.jit(functools.partial(net_forward,
                                    num_nodes=num_nodes, num_graphs=num_graphs))
    out = jax.block_until_ready(fwd(params, x, edge_attr, src, dst, batch_vec))

    ref = ref_forward(params, x, edge_attr, src, dst, batch_vec,
                      num_nodes, num_graphs)
    assert out.shape == (num_graphs, 2), out.shape
    # bf16 MXU operands (f32 accumulation) -> tolerance loosened vs the f32 reference.
    assert jnp.allclose(out, ref, atol=2e-2, rtol=2e-2), (out, ref)
    print("KERNEL_OK")
</pallas_src>

<mosaic_0001>
module attributes {stable_mosaic.version = 11 : i64} {
  func.func private @main(%arg0: i32) attributes {dimension_semantics = [#tpu.dimension_semantics<core_parallel>], iteration_bounds = array<i64: 2>, tpu.core_type = #tpu.core_type<sc_scalar_subcore>, window_params = []} {
    return
  }
}

module attributes {stable_mosaic.version = 11 : i64} {
  func.func private @main(%arg0: i32) attributes {dimension_semantics = [#tpu.dimension_semantics<core_parallel>], iteration_bounds = array<i64: 2>, tpu.core_type = #tpu.core_type<sc_scalar_subcore>, window_params = []} {
    return
  }
}

module attributes {stable_mosaic.version = 11 : i64} {
  func.func @net_kernel(%arg0: i32, %arg1: i32, %arg2: memref<128x128xbf16, #tpu.memory_space<vmem>>, %arg3: memref<128x128xbf16, #tpu.memory_space<vmem>>, %arg4: memref<1x128x128xf32, #tpu.memory_space<vmem>>, %arg5: memref<1x128x256xbf16, #tpu.memory_space<vmem>>, %arg6: memref<8x128xbf16, #tpu.memory_space<vmem>>, %arg7: memref<128x128xbf16, #tpu.memory_space<vmem>>, %arg8: memref<128x128xbf16, #tpu.memory_space<vmem>>, %arg9: memref<8x128xf32, #tpu.memory_space<vmem>>, %arg10: memref<8x128xf32, #tpu.memory_space<vmem>>, %arg11: memref<128x128xbf16, #tpu.memory_space<vmem>>, %arg12: memref<128x128xbf16, #tpu.memory_space<vmem>>) attributes {dimension_semantics = [#tpu.dimension_semantics<arbitrary>, #tpu.dimension_semantics<arbitrary>], iteration_bounds = array<i64: 2, 1>, scalar_prefetch = 0 : i64, scratch_operands = 2 : i64, tpu.core_type = #tpu.core_type<tc>, window_params = [{pipeline_mode = #tpu.pipeline_mode<synchronous>, transform_indices = @transform_0, window_bounds = array<i64: 128, 128>}, {transform_indices = @transform_1, window_bounds = array<i64: 128, 128>}, {transform_indices = @transform_2, window_bounds = array<i64: 1, 128, 128>}, {transform_indices = @transform_3, window_bounds = array<i64: 1, 128, 256>}, {pipeline_mode = #tpu.pipeline_mode<synchronous>, transform_indices = @transform_4, window_bounds = array<i64: 8, 128>}, {pipeline_mode = #tpu.pipeline_mode<synchronous>, transform_indices = @transform_5, window_bounds = array<i64: 128, 128>}, {pipeline_mode = #tpu.pipeline_mode<synchronous>, transform_indices = @transform_6, window_bounds = array<i64: 128, 128>}, {pipeline_mode = #tpu.pipeline_mode<synchronous>, transform_indices = @transform_7, window_bounds = array<i64: 8, 128>}, {pipeline_mode = #tpu.pipeline_mode<synchronous>, transform_indices = @transform_8, window_bounds = array<i64: 8, 128>}]} {
    %c0_i32 = arith.constant 0 : i32
    %0 = arith.cmpi eq, %arg0, %c0_i32 : i32
    %c0_i32_0 = arith.constant 0 : i32
    %1 = arith.cmpi eq, %arg1, %c0_i32_0 : i32
    %2 = arith.andi %0, %1 : i1
    %3 = arith.extui %2 : i1 to i32
    %c0_i32_1 = arith.constant 0 : i32
    %4 = arith.cmpi ne, %3, %c0_i32_1 : i32
    scf.if %4 {
      %c0_19 = arith.constant 0 : index
      %c0_20 = arith.constant 0 : index
      %32 = vector.load %arg2[%c0_19, %c0_20] : memref<128x128xbf16, #tpu.memory_space<vmem>>, vector<128x128xbf16>
      %c0_21 = arith.constant 0 : index
      %c0_22 = arith.constant 0 : index
      %33 = vector.load %arg11[%c0_21, %c0_22] : memref<128x128xbf16, #tpu.memory_space<vmem>>, vector<128x128xbf16>
      tpu.vector_store %arg11[%c0_21, %c0_22], %32 {strides = array<i32>} : memref<128x128xbf16, #tpu.memory_space<vmem>>, vector<128x128xbf16>,
    } else {
    }
    %c0_i32_2 = arith.constant 0 : i32
    %5 = arith.cmpi eq, %arg1, %c0_i32_2 : i32
    %6 = arith.extui %5 : i1 to i32
    %c0_i32_3 = arith.constant 0 : i32
    %7 = arith.cmpi ne, %6, %c0_i32_3 : i32
    scf.if %7 {
      %c0_19 = arith.constant 0 : index
      %c0_20 = arith.constant 0 : index
      %32 = vector.load %arg11[%c0_19, %c0_20] : memref<128x128xbf16, #tpu.memory_space<vmem>>, vector<128x128xbf16>
      %c0_21 = arith.constant 0 : index
      %c0_22 = arith.constant 0 : index
      %c128 = arith.constant 128 : index
      %33 = vector.load %arg5[%c0_21, %c0_22, %c128] : memref<1x128x256xbf16, #tpu.memory_space<vmem>>, vector<1x128x128xbf16>
      %34 = vector.shape_cast %33 : vector<1x128x128xbf16> to vector<128x128xbf16>
      %cst_23 = arith.constant dense<0.000000e+00> : vector<128x128xf32>
      %35 = tpu.matmul %32, %34, %cst_23 {dimension_numbers = #tpu.dot_dimension_numbers<[1], [0], [0], [1], [0, 0, 1, 1], [], []>} : vector<128x128xbf16>, vector<128x128xbf16>, vector<128x128xf32> -> vector<128x128xf32>
      %36 = arith.truncf %35 : vector<128x128xf32> to vector<128x128xbf16>
      %c0_24 = arith.constant 0 : index
      %c0_25 = arith.constant 0 : index
      %37 = vector.load %arg12[%c0_24, %c0_25] : memref<128x128xbf16, #tpu.memory_space<vmem>>, vector<128x128xbf16>
      tpu.vector_store %arg12[%c0_24, %c0_25], %36 {strides = array<i32>} : memref<128x128xbf16, #tpu.memory_space<vmem>>, vector<128x128xbf16>,
    } else {
    }
    %c128_i32 = arith.constant 128 : i32
    %8 = arith.muli %arg1, %c128_i32 : i32
    %9 = tpu.assume_multiple %8, 128 : i32
    %10 = arith.index_cast %9 : i32 to index
    %c0 = arith.constant 0 : index
    %11 = vector.load %arg11[%10, %c0] : memref<128x128xbf16, #tpu.memory_space<vmem>>, vector<128x128xbf16>
    %c0_4 = arith.constant 0 : index
    %c0_5 = arith.constant 0 : index
    %c0_6 = arith.constant 0 : index
    %12 = vector.load %arg5[%c0_4, %c0_5, %c0_6] : memref<1x128x256xbf16, #tpu.memory_space<vmem>>, vector<1x128x128xbf16>
    %13 = vector.shape_cast %12 : vector<1x128x128xbf16> to vector<128x128xbf16>
    %cst = arith.constant dense<0.000000e+00> : vector<128x128xf32>
    %14 = tpu.matmul %11, %13, %cst {dimension_numbers = #tpu.dot_dimension_numbers<[1], [0], [0], [1], [0, 0, 1, 1], [], []>} : vector<128x128xbf16>, vector<128x128xbf16>, vector<128x128xf32> -> vector<128x128xf32>
    %c0_7 = arith.constant 0 : index
    %c0_8 = arith.constant 0 : index
    %15 = vector.load %arg3[%c0_7, %c0_8] : memref<128x128xbf16, #tpu.memory_space<vmem>>, vector<128x128xbf16>
    %c0_9 = arith.constant 0 : index
    %c0_10 = arith.constant 0 : index
    %16 = vector.load %arg12[%c0_9, %c0_10] : memref<128x128xbf16, #tpu.memory_space<vmem>>, vector<128x128xbf16>
    %cst_11 = arith.constant dense<0.000000e+00> : vector<128x128xf32>
    %17 = tpu.matmul %15, %16, %cst_11 {dimension_numbers = #tpu.dot_dimension_numbers<[1], [0], [0], [1], [0, 0, 1, 1], [], []>} : vector<128x128xbf16>, vector<128x128xbf16>, vector<128x128xf32> -> vector<128x128xf32>
    %18 = arith.addf %14, %17 : vector<128x128xf32>
    %c0_12 = arith.constant 0 : index
    %c0_13 = arith.constant 0 : index
    %c0_14 = arith.constant 0 : index
    %19 = vector.load %arg4[%c0_12, %c0_13, %c0_14] : memref<1x128x128xf32, #tpu.memory_space<vmem>>, vector<1x128x128xf32>
    %20 = vector.shape_cast %19 : vector<1x128x128xf32> to vector<128x128xf32>
    %21 = arith.addf %18, %20 : vector<128x128xf32>
    %cst_15 = arith.constant 0.000000e+00 : f32
    %22 = vector.broadcast %cst_15 : f32 to vector<128x128xf32>
    %23 = arith.maximumf %21, %22 : vector<128x128xf32>
    %24 = arith.truncf %23 : vector<128x128xf32> to vector<128x128xbf16>
    %25 = arith.index_cast %9 : i32 to index
    %c0_16 = arith.constant 0 : index
    %26 = vector.load %arg11[%25, %c0_16] : memref<128x128xbf16, #tpu.memory_space<vmem>>, vector<128x128xbf16>
    tpu.vector_store %arg11[%25, %c0_16], %24 {strides = array<i32>} : memref<128x128xbf16, #tpu.memory_space<vmem>>, vector<128x128xbf16>,
    %c1_i32 = arith.constant 1 : i32
    %27 = arith.cmpi eq, %arg0, %c1_i32 : i32
    %c0_i32_17 = arith.constant 0 : i32
    %28 = arith.cmpi eq, %arg1, %c0_i32_17 : i32
    %29 = arith.andi %27, %28 : i1
    %30 = arith.extui %29 : i1 to i32
    %c0_i32_18 = arith.constant 0 : i32
    %31 = arith.cmpi ne, %30, %c0_i32_18 : i32
    scf.if %31 {
      %c0_19 = arith.constant 0 : index
      %c0_20 = arith.constant 0 : index
      %32 = vector.load %arg6[%c0_19, %c0_20] : memref<8x128xbf16, #tpu.memory_space<vmem>>, vector<8x128xbf16>
      %c0_21 = arith.constant 0 : index
      %c0_22 = arith.constant 0 : index
      %33 = vector.load %arg11[%c0_21, %c0_22] : memref<128x128xbf16, #tpu.memory_space<vmem>>, vector<128x128xbf16>
      %cst_23 = arith.constant dense<0.000000e+00> : vector<8x128xf32>
      %34 = tpu.matmul %32, %33, %cst_23 {dimension_numbers = #tpu.dot_dimension_numbers<[1], [0], [0], [1], [0, 0, 1, 1], [], []>} : vector<8x128xbf16>, vector<128x128xbf16>, vector<8x128xf32> -> vector<8x128xf32>
      %35 = arith.truncf %34 : vector<8x128xf32> to vector<8x128xbf16>
      %c0_24 = arith.constant 0 : index
      %c0_25 = arith.constant 0 : index
      %36 = vector.load %arg7[%c0_24, %c0_25] : memref<128x128xbf16, #tpu.memory_space<vmem>>, vector<128x128xbf16>
      %cst_26 = arith.constant dense<0.000000e+00> : vector<8x128xf32>
      %37 = tpu.matmul %35, %36, %cst_26 {dimension_numbers = #tpu.dot_dimension_numbers<[1], [0], [0], [1], [0, 0, 1, 1], [], []>} : vector<8x128xbf16>, vector<128x128xbf16>, vector<8x128xf32> -> vector<8x128xf32>
      %c0_27 = arith.constant 0 : index
      %c0_28 = arith.constant 0 : index
      %38 = vector.load %arg9[%c0_27, %c0_28] : memref<8x128xf32, #tpu.memory_space<vmem>>, vector<1x128xf32>
      %39 = vector.broadcast %38 : vector<1x128xf32> to vector<8x128xf32>
      %40 = arith.addf %37, %39 : vector<8x128xf32>
      %cst_29 = arith.constant 0.000000e+00 : f32
      %41 = vector.broadcast %cst_29 : f32 to vector<8x128xf32>
      %42 = arith.maximumf %40, %41 : vector<8x128xf32>
      %43 = arith.truncf %42 : vector<8x128xf32> to vector<8x128xbf16>
      %c0_30 = arith.constant 0 : index
      %c0_31 = arith.constant 0 : index
      %44 = vector.load %arg8[%c0_30, %c0_31] : memref<128x128xbf16, #tpu.memory_space<vmem>>, vector<128x128xbf16>
      %cst_32 = arith.constant dense<0.000000e+00> : vector<8x128xf32>
      %45 = tpu.matmul %43, %44, %cst_32 {dimension_numbers = #tpu.dot_dimension_numbers<[1], [0], [0], [1], [0, 0, 1, 1], [], []>} : vector<8x128xbf16>, vector<128x128xbf16>, vector<8x128xf32> -> vector<8x128xf32>
      %c1 = arith.constant 1 : index
      %c0_33 = arith.constant 0 : index
      %46 = vector.load %arg9[%c1, %c0_33] : memref<8x128xf32, #tpu.memory_space<vmem>>, vector<1x128xf32>
      %47 = vector.broadcast %46 : vector<1x128xf32> to vector<8x128xf32>
      %48 = arith.addf %45, %47 : vector<8x128xf32>
      %c0_34 = arith.constant 0 : index
      %c0_35 = arith.constant 0 : index
      %49 = vector.load %arg10[%c0_34, %c0_35] : memref<8x128xf32, #tpu.memory_space<vmem>>, vector<8x128xf32>
      tpu.vector_store %arg10[%c0_34, %c0_35], %48 {strides = array<i32>} : memref<8x128xf32, #tpu.memory_space<vmem>>, vector<8x128xf32>,
    } else {
    }
    return
  }
  func.func @transform_0(%arg0: i32, %arg1: i32) -> (i32, i32) {
    %c0_i32 = arith.constant 0 : i32
    %c0_i32_0 = arith.constant 0 : i32
    %c0_i32_1 = arith.constant 0 : i32
    return %c0_i32, %c0_i32_0 : i32, i32
  }
  func.func @transform_1(%arg0: i32, %arg1: i32) -> (i32, i32) {
    %c0_i32 = arith.constant 0 : i32
    %c0_i32_0 = arith.constant 0 : i32
    return %arg1, %c0_i32 : i32, i32
  }
  func.func @transform_2(%arg0: i32, %arg1: i32) -> (i32, i32, i32) {
    %c0_i32 = arith.constant 0 : i32
    %c0_i32_0 = arith.constant 0 : i32
    return %arg0, %arg1, %c0_i32 : i32, i32, i32
  }
  func.func @transform_3(%arg0: i32, %arg1: i32) -> (i32, i32, i32) {
    %c0_i32 = arith.constant 0 : i32
    %c0_i32_0 = arith.constant 0 : i32
    %c0_i32_1 = arith.constant 0 : i32
    return %arg0, %c0_i32, %c0_i32_0 : i32, i32, i32
  }
  func.func @transform_4(%arg0: i32, %arg1: i32) -> (i32, i32) {
    %c0_i32 = arith.constant 0 : i32
    %c0_i32_0 = arith.constant 0 : i32
    %c0_i32_1 = arith.constant 0 : i32
    return %c0_i32, %c0_i32_0 : i32, i32
  }
  func.func @transform_5(%arg0: i32, %arg1: i32) -> (i32, i32) {
    %c0_i32 = arith.constant 0 : i32
    %c0_i32_0 = arith.constant 0 : i32
    %c0_i32_1 = arith.constant 0 : i32
    return %c0_i32, %c0_i32_0 : i32, i32
  }
  func.func @transform_6(%arg0: i32, %arg1: i32) -> (i32, i32) {
    %c0_i32 = arith.constant 0 : i32
    %c0_i32_0 = arith.constant 0 : i32
    %c0_i32_1 = arith.constant 0 : i32
    return %c0_i32, %c0_i32_0 : i32, i32
  }
  func.func @transform_7(%arg0: i32, %arg1: i32) -> (i32, i32) {
    %c0_i32 = arith.constant 0 : i32
    %c0_i32_0 = arith.constant 0 : i32
    %c0_i32_1 = arith.constant 0 : i32
    return %c0_i32, %c0_i32_0 : i32, i32
  }
  func.func @transform_8(%arg0: i32, %arg1: i32) -> (i32, i32) {
    %c0_i32 = arith.constant 0 : i32
    %c0_i32_0 = arith.constant 0 : i32
    %c0_i32_1 = arith.constant 0 : i32
    return %c0_i32, %c0_i32_0 : i32, i32
  }
}

</mosaic_0001>

<llo_original>
// kernel: net_forward.1
$region0: #{net_forward.1}
  #allocation0 [shape = 'u32[]', space=smem, size = 0x4, offset = 0x4, fixed_abs, tag = 'smem constant byte address 0x4 - core index']
  #allocation1 [shape = 'u32[144,128]{1,0:T(1,128)}', space=vmem, size = 0x12000, scoped, tag = 'internal scratch']
  #allocation2 [shape = 'bf16[128,128]{1,0:T(16,128)(2,1)}', space=vmem, size = 0x8000, scoped, tag = 'scratch operand']
  #allocation3 [shape = 'bf16[128,128]{1,0:T(16,128)(2,1)}', space=vmem, size = 0x8000, scoped, tag = 'scratch operand']
  %s0 = inlined_call_operand.vmem [shape: bf16[128,128], index: 0, kind: input, shape index: {}]
  %s1 = inlined_call_operand.vmem [shape: bf16[128,128], index: 1, kind: input, shape index: {}]
  %s2 = inlined_call_operand.vmem [shape: f32[2,128,128], index: 2, kind: input, shape index: {}]
  %s3 = inlined_call_operand.vmem [shape: bf16[2,128,256], index: 3, kind: input, shape index: {}]
  %s4 = inlined_call_operand.vmem [shape: bf16[8,128], index: 4, kind: input, shape index: {}]
  %s5 = inlined_call_operand.vmem [shape: bf16[128,128], index: 5, kind: input, shape index: {}]
  %s6 = inlined_call_operand.vmem [shape: bf16[128,128], index: 6, kind: input, shape index: {}]
  %s7 = inlined_call_operand.vmem [shape: f32[8,128], index: 7, kind: input, shape index: {}]
  %s8 = inlined_call_operand.vmem [shape: f32[8,128], index: 8, kind: output, shape index: {}]
  %s9 = sld [smem:[#allocation0]]
  $region77: #{net_forward.1} parent=0
    _
  %s11 = ssub.s32 1, %s9
  %s12 = scalar_select 0, %s11, %s9
  loop: start=0, step=1, limit=4
  $region2: #{net_forward.1} parent=0 // loop_pre_header
    _
  $region3: #{net_forward.1} parent=0 // loop_header
    %s14 = sphi 0, %s18
    %p15 = scmp.ge.s32.totalorder %s14, 4
    %s21 = sphi 0, %s33
    %s22 = sphi 0, %s29
    %s23 = sphi 0, %s21
    %s24 = sphi 0, %s22
    %s25 = sphi 0, %s23
    %s26 = sphi 0, %s24
    %s34 = sphi 0, %s34
    %s36 = sphi 0, %s34
    %s37 = sphi 0, %s36
    %s51 = sphi 0, %s37
    %s57 = sphi 0, %s59
    %s60 = sphi 0, %s57
    %s61 = sphi 0, %s60
    %s77 = sphi 0, %s61
    %s85 = sphi 0, %s87
    %s88 = sphi 0, %s85
    %s89 = sphi 0, %s88
    %s105 = sphi 0, %s89
    %s111 = sphi 0, %s113
    %s114 = sphi 0, %s111
    %s115 = sphi 0, %s114
    %s131 = sphi 0, %s115
    %s135 = sphi 0, %s135
    %s137 = sphi 0, %s135
    %s138 = sphi 0, %s137
    %s152 = sphi 0, %s138
    %s156 = sphi 0, %s156
    %s158 = sphi 0, %s156
    %s159 = sphi 0, %s158
    %s173 = sphi 0, %s159
    %s177 = sphi 0, %s177
    %s179 = sphi 0, %s177
    %s180 = sphi 0, %s179
    %s194 = sphi 0, %s180
    %s198 = sphi 0, %s198
    %s200 = sphi 0, %s198
    %s201 = sphi 0, %s200
    %s215 = sphi 0, %s201
    %s219 = sphi 0, %s219
    %s221 = sphi 0, %s219
    %s222 = sphi 0, %s221
    %s236 = sphi 0, %s222
  $region4: #{net_forward.1} parent=0 // loop_header_branch
    %17 = sbr.rel (%p15) target = $region8
  $region5: #{net_forward.1} parent=0 // loop_body
    %s19 = ssub.s32 %s14, 1
    %s20 = ssub.s32 %s14, 2
    %s27 = sadd.s32 1, %s22
    %p28 = scmp.ge.s32.totalorder %s27, 1
    %s29 = scalar_select %p28, 0, %s27
    %s30 = sadd.s32 1, %s21
    %s31 = scalar_select %p28, %s30, %s21
    %p32 = scmp.ge.s32.totalorder %s31, 2
    %s33 = scalar_select %p32, 0, %s31
    %s35 = sadd.s32 %s34, 1
    %p38 = scmp.eq.s32.totalorder %s14, 1
    %p39 = scmp.ne.s32.totalorder %s34, %s36
    %p40 = scmp.eq.s32.totalorder %s14, 0
    %p41 = por %p39, %p40
    %p42 = scmp.ne.s32.totalorder %s34, %s36
    %p43 = scmp.eq.s32.totalorder %s19, 1
    %p44 = por %p42, %p43
    %p45 = scmp.ne.s32.totalorder %s36, %s37
    %p46 = scmp.eq.s32.totalorder %s19, 0
    %p47 = por %p45, %p46
    %p48 = scmp.ne.s32.totalorder %s36, %s37
    %p49 = scmp.eq.s32.totalorder %s20, 1
    %p50 = por %p48, %p49
    %p52 = scmp.ne.s32.totalorder %s37, %s51
    %p53 = scmp.eq.s32.totalorder %s20, 0
    %p54 = por %p52, %p53
    %s55 = ssub.s32 %s22, %s29
    %p56 = scmp.eq.s32.totalorder %s55, 0
    %s58 = sadd.s32 %s57, 1
    %s59 = scalar_select %p56, %s57, %s58
    %p62 = pneg %p56
    %p63 = scmp.eq.s32.totalorder %s14, 1
    %p64 = por %p62, %p63
    %p65 = scmp.ne.s32.totalorder %s57, %s60
    %p66 = scmp.eq.s32.totalorder %s14, 0
    %p67 = por %p65, %p66
    %p68 = scmp.ne.s32.totalorder %s57, %s60
    %p69 = scmp.eq.s32.totalorder %s19, 1
    %p70 = por %p68, %p69
    %p71 = scmp.ne.s32.totalorder %s60, %s61
    %p72 = scmp.eq.s32.totalorder %s19, 0
    %p73 = por %p71, %p72
    %p74 = scmp.ne.s32.totalorder %s60, %s61
    %p75 = scmp.eq.s32.totalorder %s20, 1
    %p76 = por %p74, %p75
    %p78 = scmp.ne.s32.totalorder %s61, %s77
    %p79 = scmp.eq.s32.totalorder %s20, 0
    %p80 = por %p78, %p79
    %s81 = ssub.s32 %s21, %s33
    %s82 = ssub.s32 %s22, %s29
    %s83 = sor.u32 %s81, %s82
    %p84 = scmp.eq.s32.totalorder %s83, 0
    %s86 = sadd.s32 %s85, 1
    %s87 = scalar_select %p84, %s85, %s86
    %p90 = pneg %p84
    %p91 = scmp.eq.s32.totalorder %s14, 1
    %p92 = por %p90, %p91
    %p93 = scmp.ne.s32.totalorder %s85, %s88
    %p94 = scmp.eq.s32.totalorder %s14, 0
    %p95 = por %p93, %p94
    %p96 = scmp.ne.s32.totalorder %s85, %s88
    %p97 = scmp.eq.s32.totalorder %s19, 1
    %p98 = por %p96, %p97
    %p99 = scmp.ne.s32.totalorder %s88, %s89
    %p100 = scmp.eq.s32.totalorder %s19, 0
    %p101 = por %p99, %p100
    %p102 = scmp.ne.s32.totalorder %s88, %s89
    %p103 = scmp.eq.s32.totalorder %s20, 1
    %p104 = por %p102, %p103
    %p106 = scmp.ne.s32.totalorder %s89, %s105
    %p107 = scmp.eq.s32.totalorder %s20, 0
    %p108 = por %p106, %p107
    %s109 = ssub.s32 %s21, %s33
    %p110 = scmp.eq.s32.totalorder %s109, 0
    %s112 = sadd.s32 %s111, 1
    %s113 = scalar_select %p110, %s111, %s112
    %p116 = pneg %p110
    %p117 = scmp.eq.s32.totalorder %s14, 1
    %p118 = por %p116, %p117
    %p119 = scmp.ne.s32.totalorder %s111, %s114
    %p120 = scmp.eq.s32.totalorder %s14, 0
    %p121 = por %p119, %p120
    %p122 = scmp.ne.s32.totalorder %s111, %s114
    %p123 = scmp.eq.s32.totalorder %s19, 1
    %p124 = por %p122, %p123
    %p125 = scmp.ne.s32.totalorder %s114, %s115
    %p126 = scmp.eq.s32.totalorder %s19, 0
    %p127 = por %p125, %p126
    %p128 = scmp.ne.s32.totalorder %s114, %s115
    %p129 = scmp.eq.s32.totalorder %s20, 1
    %p130 = por %p128, %p129
    %p132 = scmp.ne.s32.totalorder %s115, %s131
    %p133 = scmp.eq.s32.totalorder %s20, 0
    %p134 = por %p132, %p133
    %s136 = sadd.s32 %s135, 1
    %p139 = scmp.eq.s32.totalorder %s14, 1
    %p140 = scmp.ne.s32.totalorder %s135, %s137
    %p141 = scmp.eq.s32.totalorder %s14, 0
    %p142 = por %p140, %p141
    %p143 = scmp.ne.s32.totalorder %s135, %s137
    %p144 = scmp.eq.s32.totalorder %s19, 1
    %p145 = por %p143, %p144
    %p146 = scmp.ne.s32.totalorder %s137, %s138
    %p147 = scmp.eq.s32.totalorder %s19, 0
    %p148 = por %p146, %p147
    %p149 = scmp.ne.s32.totalorder %s137, %s138
    %p150 = scmp.eq.s32.totalorder %s20, 1
    %p151 = por %p149, %p150
    %p153 = scmp.ne.s32.totalorder %s138, %s152
    %p154 = scmp.eq.s32.totalorder %s20, 0
    %p155 = por %p153, %p154
    %s157 = sadd.s32 %s156, 1
    %p160 = scmp.eq.s32.totalorder %s14, 1
    %p161 = scmp.ne.s32.totalorder %s156, %s158
    %p162 = scmp.eq.s32.totalorder %s14, 0
    %p163 = por %p161, %p162
    %p164 = scmp.ne.s32.totalorder %s156, %s158
    %p165 = scmp.eq.s32.totalorder %s19, 1
    %p166 = por %p164, %p165
    %p167 = scmp.ne.s32.totalorder %s158, %s159
    %p168 = scmp.eq.s32.totalorder %s19, 0
    %p169 = por %p167, %p168
    %p170 = scmp.ne.s32.totalorder %s158, %s159
    %p171 = scmp.eq.s32.totalorder %s20, 1
    %p172 = por %p170, %p171
    %p174 = scmp.ne.s32.totalorder %s159, %s173
    %p175 = scmp.eq.s32.totalorder %s20, 0
    %p176 = por %p174, %p175
    %s178 = sadd.s32 %s177, 1
    %p181 = scmp.eq.s32.totalorder %s14, 1
    %p182 = scmp.ne.s32.totalorder %s177, %s179
    %p183 = scmp.eq.s32.totalorder %s14, 0
    %p184 = por %p182, %p183
    %p185 = scmp.ne.s32.totalorder %s177, %s179
    %p186 = scmp.eq.s32.totalorder %s19, 1
    %p187 = por %p185, %p186
    %p188 = scmp.ne.s32.totalorder %s179, %s180
    %p189 = scmp.eq.s32.totalorder %s19, 0
    %p190 = por %p188, %p189
    %p191 = scmp.ne.s32.totalorder %s179, %s180
    %p192 = scmp.eq.s32.totalorder %s20, 1
    %p193 = por %p191, %p192
    %p195 = scmp.ne.s32.totalorder %s180, %s194
    %p196 = scmp.eq.s32.totalorder %s20, 0
    %p197 = por %p195, %p196
    %s199 = sadd.s32 %s198, 1
    %p202 = scmp.eq.s32.totalorder %s14, 1
    %p203 = scmp.ne.s32.totalorder %s198, %s200
    %p204 = scmp.eq.s32.totalorder %s14, 0
    %p205 = por %p203, %p204
    %p206 = scmp.ne.s32.totalorder %s198, %s200
    %p207 = scmp.eq.s32.totalorder %s19, 1
    %p208 = por %p206, %p207
    %p209 = scmp.ne.s32.totalorder %s200, %s201
    %p210 = scmp.eq.s32.totalorder %s19, 0
    %p211 = por %p209, %p210
    %p212 = scmp.ne.s32.totalorder %s200, %s201
    %p213 = scmp.eq.s32.totalorder %s20, 1
    %p214 = por %p212, %p213
    %p216 = scmp.ne.s32.totalorder %s201, %s215
    %p217 = scmp.eq.s32.totalorder %s20, 0
    %p218 = por %p216, %p217
    %s220 = sadd.s32 %s219, 1
    %p223 = scmp.eq.s32.totalorder %s14, 1
    %p224 = scmp.ne.s32.totalorder %s219, %s221
    %p225 = scmp.eq.s32.totalorder %s14, 0
    %p226 = por %p224, %p225
    %p227 = scmp.ne.s32.totalorder %s219, %s221
    %p228 = scmp.eq.s32.totalorder %s19, 1
    %p229 = por %p227, %p228
    %p230 = scmp.ne.s32.totalorder %s221, %s222
    %p231 = scmp.eq.s32.totalorder %s19, 0
    %p232 = por %p230, %p231
    %p233 = scmp.ne.s32.totalorder %s221, %s222
    %p234 = scmp.eq.s32.totalorder %s20, 1
    %p235 = por %p233, %p234
    %p237 = scmp.ne.s32.totalorder %s222, %s236
    %p238 = scmp.eq.s32.totalorder %s20, 0
    %p239 = por %p237, %p238
    %p240 = scmp.le.s32.totalorder 1, %s14
    %p241 = scmp.lt.s32.totalorder %s14, 3
    %p242 = pnand %p240, %p241
    %p243 = pneg %p242
    // Predicated region
    $region9: #{net_forward.1} parent=5 // pred_check
      _
    $region10: #{net_forward.1} parent=5 // pred_check_branch
      %245 = sbr.rel (%p242) target = $region12
    $region11: #{net_forward.1} parent=5 // pred_region
      %s246 = ssub.s32 %s14, 1
      // Predicated region
      $region13: #{net_forward.1} parent=11 // pred_check
        %p247 = pneg %p47
      $region14: #{net_forward.1} parent=11 // pred_check_branch
        %249 = sbr.rel (%p247) target = $region16
      $region15: #{net_forward.1} parent=11 // pred_region
        _
      $region16: #{net_forward.1} parent=11 // pred_fallthru
        _
      // Predicated region
      $region17: #{net_forward.1} parent=11 // pred_check
        %p250 = pneg %p73
      $region18: #{net_forward.1} parent=11 // pred_check_branch
        %252 = sbr.rel (%p250) target = $region20
      $region19: #{net_forward.1} parent=11 // pred_region
        %s253 = smul.u32 16, %s24
        %p254 = scmp.lt.s32.totalorder %s253, 15
        %s255 = scalar_select %p254, %s253, 15
        %s256 = smul.addr %s255, 4
        %s257 = scalar_lea.vmem %s1, %s256
        %s258 = smul.u32 16, %s24
      $region20: #{net_forward.1} parent=11 // pred_fallthru
        _
      // Predicated region
      $region21: #{net_forward.1} parent=11 // pred_check
        %p259 = pneg %p148
      $region22: #{net_forward.1} parent=11 // pred_check_branch
        %261 = sbr.rel (%p259) target = $region24
      $region23: #{net_forward.1} parent=11 // pred_region
        _
      $region24: #{net_forward.1} parent=11 // pred_fallthru
        _
      // Predicated region
      $region25: #{net_forward.1} parent=11 // pred_check
        %p262 = pneg %p169
      $region26: #{net_forward.1} parent=11 // pred_check_branch
        %264 = sbr.rel (%p262) target = $region28
      $region27: #{net_forward.1} parent=11 // pred_region
        _
      $region28: #{net_forward.1} parent=11 // pred_fallthru
        _
      // Predicated region
      $region29: #{net_forward.1} parent=11 // pred_check
        %p265 = pneg %p190
      $region30: #{net_forward.1} parent=11 // pred_check_branch
        %267 = sbr.rel (%p265) target = $region32
      $region31: #{net_forward.1} parent=11 // pred_region
        _
      $region32: #{net_forward.1} parent=11 // pred_fallthru
        _
      // Predicated region
      $region33: #{net_forward.1} parent=11 // pred_check
        %p268 = pneg %p211
      $region34: #{net_forward.1} parent=11 // pred_check_branch
        %270 = sbr.rel (%p268) target = $region36
      $region35: #{net_forward.1} parent=11 // pred_region
        _
      $region36: #{net_forward.1} parent=11 // pred_fallthru
        _
    $region12: #{net_forward.1} parent=5 // pred_fallthru
      _
    %p271 = scmp.lt.s32.totalorder %s14, 2
    // Predicated region
    $region37: #{net_forward.1} parent=5 // pred_check
      %p272 = pneg %p271
    $region38: #{net_forward.1} parent=5 // pred_check_branch
      %274 = sbr.rel (%p272) target = $region40
    $region39: #{net_forward.1} parent=5 // pred_region
      // Predicated region
      $region41: #{net_forward.1} parent=39 // pred_check
        %p275 = pneg %p95
      $region42: #{net_forward.1} parent=39 // pred_check_branch
        %277 = sbr.rel (%p275) target = $region44
      $region43: #{net_forward.1} parent=39 // pred_region
        %s278 = smul.u32 16, %s22
        %p279 = scmp.lt.s32.totalorder %s21, 1
        %s280 = scalar_select %p279, %s21, 1
        %p281 = scmp.lt.s32.totalorder %s278, 15
        %s282 = scalar_select %p281, %s278, 15
        %s283 = smul.addr %s280, 16
        %s284 = sadd.s32 %s282, %s283
        %s285 = smul.addr %s284, 8
        %s286 = scalar_lea.vmem %s2, %s285
        %s287 = smul.u32 16, %s22
      $region44: #{net_forward.1} parent=39 // pred_fallthru
        _
      // Predicated region
      $region45: #{net_forward.1} parent=39 // pred_check
        %p288 = pneg %p121
      $region46: #{net_forward.1} parent=39 // pred_check_branch
        %290 = sbr.rel (%p288) target = $region48
      $region47: #{net_forward.1} parent=39 // pred_region
        %p291 = scmp.lt.s32.totalorder %s21, 1
        %s292 = scalar_select %p291, %s21, 1
        %s293 = smul.addr %s292, 32
        %s294 = smul.addr %s293, 4
        %s295 = scalar_lea.vmem %s3, %s294
      $region48: #{net_forward.1} parent=39 // pred_fallthru
        _
    $region40: #{net_forward.1} parent=5 // pred_fallthru
      _
    %p296 = scmp.le.s32.totalorder 1, %s14
    %p297 = scmp.lt.s32.totalorder %s14, 3
    %p298 = pnand %p296, %p297
    %p299 = pneg %p298
    // Predicated region
    $region49: #{net_forward.1} parent=5 // pred_check
      _
    $region50: #{net_forward.1} parent=5 // pred_check_branch
      %301 = sbr.rel (%p298) target = $region52
    $region51: #{net_forward.1} parent=5 // pred_region
      %s302 = ssub.s32 %s14, 1
      %p303 = pneg %p47
      %p304 = pneg %p44
      %s305 = smul.u32 16, %s24
      %p306 = scmp.lt.s32.totalorder %s305, 15
      %s307 = scalar_select %p306, %s305, 15
      %s308 = smul.addr %s307, 4
      %s309 = scalar_lea.vmem %s1, %s308
      %p310 = pneg %p73
      %p311 = pneg %p70
      %s312 = smul.u32 16, %s24
      %p313 = scmp.lt.s32.totalorder %s23, 1
      %s314 = scalar_select %p313, %s23, 1
      %p315 = scmp.lt.s32.totalorder %s312, 15
      %s316 = scalar_select %p315, %s312, 15
      %s317 = smul.addr %s314, 16
      %s318 = sadd.s32 %s316, %s317
      %s319 = smul.addr %s318, 8
      %s320 = scalar_lea.vmem %s2, %s319
      %p321 = pneg %p101
      %p322 = pneg %p98
      %p323 = scmp.lt.s32.totalorder %s23, 1
      %s324 = scalar_select %p323, %s23, 1
      %s325 = smul.addr %s324, 32
      %s326 = smul.addr %s325, 4
      %s327 = scalar_lea.vmem %s3, %s326
      %p328 = pneg %p127
      %p329 = pneg %p124
      %p330 = pneg %p148
      %p331 = pneg %p145
      %p332 = pneg %p169
      %p333 = pneg %p166
      %p334 = pneg %p190
      %p335 = pneg %p187
      %p336 = pneg %p211
      %p337 = pneg %p208
      %p338 = pneg %p232
      %p339 = pneg %p229
      %s340 = smul.u32 16, %s24
      %p341 = scmp.lt.s32.totalorder %s340, 15
      %s342 = scalar_select %p341, %s340, 15
      %s343 = smul.addr %s342, 4
      %s344 = scalar_lea.vmem %s1, %s343
      %s345 = smul.u32 16, %s24
      %s346 = smul.u32 16, %s24
      %p347 = scmp.lt.s32.totalorder %s23, 1
      %s348 = scalar_select %p347, %s23, 1
      %p349 = scmp.lt.s32.totalorder %s346, 15
      %s350 = scalar_select %p349, %s346, 15
      %s351 = smul.addr %s348, 16
      %s352 = sadd.s32 %s350, %s351
      %s353 = smul.addr %s352, 8
      %s354 = scalar_lea.vmem %s2, %s353
      %s355 = smul.u32 16, %s24
      %p356 = scmp.lt.s32.totalorder %s23, 1
      %s357 = scalar_select %p356, %s23, 1
      %s358 = smul.addr %s357, 32
      %s359 = smul.addr %s358, 4
      %s360 = scalar_lea.vmem %s3, %s359
      %p362 = scmp.eq.s32.totalorder %s23, 0
      %p363 = scmp.eq.s32.totalorder %s24, 0
      %p364 = pnand %p362, %p363
      %p365 = pneg %p364
      // Predicated region
      $region53: #{net_forward.1} parent=51 // pred_check
        _
      $region54: #{net_forward.1} parent=51 // pred_check_branch
        %367 = sbr.rel (%p364) target = $region56
      $region55: #{net_forward.1} parent=51 // pred_region
        %v368 = vld [vmem:[%s0] sm:$0xf]
        %v369 = vld [vmem:[%s0 + $0x4] sm:$0xf]
        %v370 = vld [vmem:[%s0 + $0x8] sm:$0xf]
        %v371 = vld [vmem:[%s0 + $0xc] sm:$0xf]
        %v372 = vld [vmem:[%s0 + $0x10] sm:$0xf]
        %v373 = vld [vmem:[%s0 + $0x14] sm:$0xf]
        %v374 = vld [vmem:[%s0 + $0x18] sm:$0xf]
        %v375 = vld [vmem:[%s0 + $0x1c] sm:$0xf]
        %v376 = vld [vmem:[%s0 + $0x20] sm:$0xf]
        %v377 = vld [vmem:[%s0 + $0x24] sm:$0xf]
        %v378 = vld [vmem:[%s0 + $0x28] sm:$0xf]
        %v379 = vld [vmem:[%s0 + $0x2c] sm:$0xf]
        %v380 = vld [vmem:[%s0 + $0x30] sm:$0xf]
        %v381 = vld [vmem:[%s0 + $0x34] sm:$0xf]
        %v382 = vld [vmem:[%s0 + $0x38] sm:$0xf]
        %v383 = vld [vmem:[%s0 + $0x3c] sm:$0xf]
        %v400 = vunpack.c.l.b16 %v368
        %v401 = vunpack.c.l.b16 %v369
        %v402 = vunpack.c.l.b16 %v370
        %v403 = vunpack.c.l.b16 %v371
        %v404 = vunpack.c.l.b16 %v372
        %v405 = vunpack.c.l.b16 %v373
        %v406 = vunpack.c.l.b16 %v374
        %v407 = vunpack.c.l.b16 %v375
        %v408 = vunpack.c.l.b16 %v376
        %v409 = vunpack.c.l.b16 %v377
        %v410 = vunpack.c.l.b16 %v378
        %v411 = vunpack.c.l.b16 %v379
        %v412 = vunpack.c.l.b16 %v380
        %v413 = vunpack.c.l.b16 %v381
        %v414 = vunpack.c.l.b16 %v382
        %v415 = vunpack.c.l.b16 %v383
        %v416 = vpack.c.b16 %v401, %v400
        %v417 = vpack.c.b16 %v403, %v402
        %v418 = vpack.c.b16 %v405, %v404
        %v419 = vpack.c.b16 %v407, %v406
        %v420 = vpack.c.b16 %v409, %v408
        %v421 = vpack.c.b16 %v411, %v410
        %v422 = vpack.c.b16 %v413, %v412
        %v423 = vpack.c.b16 %v415, %v414
        %432 = vst [vmem:[#allocation2] sm:$0xff] %v416
        %433 = vst [vmem:[#allocation2 + $0x8] sm:$0xff] %v417
        %434 = vst [vmem:[#allocation2 + $0x10] sm:$0xff] %v418
        %435 = vst [vmem:[#allocation2 + $0x18] sm:$0xff] %v419
        %436 = vst [vmem:[#allocation2 + $0x20] sm:$0xff] %v420
        %437 = vst [vmem:[#allocation2 + $0x28] sm:$0xff] %v421
        %438 = vst [vmem:[#allocation2 + $0x30] sm:$0xff] %v422
        %439 = vst [vmem:[#allocation2 + $0x38] sm:$0xff] %v423
      $region56: #{net_forward.1} parent=51 // pred_fallthru
        _
      // Predicated region
      $region57: #{net_forward.1} parent=51 // pred_check
        %p440 = pneg %p363
      $region58: #{net_forward.1} parent=51 // pred_check_branch
        %442 = sbr.rel (%p440) target = $region60
      $region59: #{net_forward.1} parent=51 // pred_region
        %v443 = vld [vmem:[#allocation2] sm:$0xff]
        %v444 = vld [vmem:[#allocation2 + $0x8] sm:$0xff]
        %v445 = vld [vmem:[#allocation2 + $0x10] sm:$0xff]
        %v446 = vld [vmem:[#allocation2 + $0x18] sm:$0xff]
        %v447 = vld [vmem:[#allocation2 + $0x20] sm:$0xff]
        %v448 = vld [vmem:[#allocation2 + $0x28] sm:$0xff]
        %v449 = vld [vmem:[#allocation2 + $0x30] sm:$0xff]
        %v450 = vld [vmem:[#allocation2 + $0x38] sm:$0xff]
        %v451 = vld [vmem:[%s360 + $0x4] sm:$0xf]
        %v452 = vld [vmem:[%s360 + $0xc] sm:$0xf]
        %v453 = vld [vmem:[%s360 + $0x14] sm:$0xf]
        %v454 = vld [vmem:[%s360 + $0x1c] sm:$0xf]
        %v455 = vld [vmem:[%s360 + $0x24] sm:$0xf]
        %v456 = vld [vmem:[%s360 + $0x2c] sm:$0xf]
        %v457 = vld [vmem:[%s360 + $0x34] sm:$0xf]
        %v458 = vld [vmem:[%s360 + $0x3c] sm:$0xf]
        %v459 = vld [vmem:[%s360 + $0x44] sm:$0xf]
        %v460 = vld [vmem:[%s360 + $0x4c] sm:$0xf]
        %v461 = vld [vmem:[%s360 + $0x54] sm:$0xf]
        %v462 = vld [vmem:[%s360 + $0x5c] sm:$0xf]
        %v463 = vld [vmem:[%s360 + $0x64] sm:$0xf]
        %v464 = vld [vmem:[%s360 + $0x6c] sm:$0xf]
        %v465 = vld [vmem:[%s360 + $0x74] sm:$0xf]
        %v466 = vld [vmem:[%s360 + $0x7c] sm:$0xf]
        %v483 = vunpack.c.l.b16 %v451
        %v484 = vunpack.c.l.b16 %v452
        %v485 = vunpack.c.l.b16 %v453
        %v486 = vunpack.c.l.b16 %v454
        %v487 = vunpack.c.l.b16 %v455
        %v488 = vunpack.c.l.b16 %v456
        %v489 = vunpack.c.l.b16 %v457
        %v490 = vunpack.c.l.b16 %v458
        %v491 = vunpack.c.l.b16 %v459
        %v492 = vunpack.c.l.b16 %v460
        %v493 = vunpack.c.l.b16 %v461
        %v494 = vunpack.c.l.b16 %v462
        %v495 = vunpack.c.l.b16 %v463
        %v496 = vunpack.c.l.b16 %v464
        %v497 = vunpack.c.l.b16 %v465
        %v498 = vunpack.c.l.b16 %v466
        %v499 = vpack.c.b16 %v484, %v483
        %v500 = vpack.c.b16 %v486, %v485
        %v501 = vpack.c.b16 %v488, %v487
        %v502 = vpack.c.b16 %v490, %v489
        %v503 = vpack.c.b16 %v492, %v491
        %v504 = vpack.c.b16 %v494, %v493
        %v505 = vpack.c.b16 %v496, %v495
        %v506 = vpack.c.b16 %v498, %v497
        %515 = vmatprep.subr.bf16.mxu0 0
        %516 = vmatpush1.bf16.msra.mxu0 %v499
        %517 = vmatprep.subr.bf16.mxu0 0
        %518 = vmatpush1.bf16.msra.mxu0 %v500
        %519 = vmatprep.subr.bf16.mxu0 0
        %520 = vmatpush1.bf16.msra.mxu0 %v501
        %521 = vmatprep.subr.bf16.mxu0 0
        %522 = vmatpush1.bf16.msra.mxu0 %v502
        %523 = vmatprep.subr.bf16.mxu0 0
        %524 = vmatpush1.bf16.msra.mxu0 %v503
        %525 = vmatprep.subr.bf16.mxu0 0
        %526 = vmatpush1.bf16.msra.mxu0 %v504
        %527 = vmatprep.subr.bf16.mxu0 0
        %528 = vmatpush1.bf16.msra.mxu0 %v505
        %529 = vmatprep.subr.bf16.mxu0 0
        %530 = vmatpush1.bf16.msra.mxu0 %v506
        %531 = vmatprep.subr.bf16.mxu0 0
        %532 = vmatpush1.bf16.msra.mxu0 0
        %533 = vmatprep.subr.bf16.mxu0 0
        %534 = vmatpush1.bf16.msra.mxu0 0
        %535 = vmatprep.subr.bf16.mxu0 0
        %536 = vmatpush1.bf16.msra.mxu0 0
        %537 = vmatprep.subr.bf16.mxu0 0
        %538 = vmatpush1.bf16.msra.mxu0 0
        %539 = vmatprep.subr.bf16.mxu0 0
        %540 = vmatpush1.bf16.msra.mxu0 0
        %541 = vmatprep.subr.bf16.mxu0 0
        %542 = vmatpush1.bf16.msra.mxu0 0
        %543 = vmatprep.subr.bf16.mxu0 0
        %544 = vmatpush1.bf16.msra.mxu0 0
        %545 = vmatprep.subr.bf16.mxu0 0
        %546 = vmatpush1.bf16.msra.mxu0 0
        %547 = vmatprep.mubr.bf16.mxu0 0
        %548 = vmatmul.mubr.bf16.gmra.mrb[0].mxu0 %v443
        %v549 = vpop.f32.mrb[0].mxu0
        %v550 = vadd.f32 0.0, %v549
        %v551 = vpop.f32.mrb[0].mxu0
        %v552 = vpop.f32.mrb[0].mxu0
        %v553 = vadd.f32 0.0, %v552
        %v554 = vpop.f32.mrb[0].mxu0
        %555 = vmatprep.mubr.bf16.mxu0 0
        %556 = vmatmul.mubr.bf16.gmra.mrb[0].mxu0 %v444
        %v557 = vpop.f32.mrb[0].mxu0
        %v558 = vadd.f32 0.0, %v557
        %v559 = vpop.f32.mrb[0].mxu0
        %v560 = vpop.f32.mrb[0].mxu0
        %v561 = vadd.f32 0.0, %v560
        %v562 = vpop.f32.mrb[0].mxu0
        %563 = vmatprep.mubr.bf16.mxu0 0
        %564 = vmatmul.mubr.bf16.gmra.mrb[0].mxu0 %v445
        %v565 = vpop.f32.mrb[0].mxu0
        %v566 = vadd.f32 0.0, %v565
        %v567 = vpop.f32.mrb[0].mxu0
        %v568 = vpop.f32.mrb[0].mxu0
        %v569 = vadd.f32 0.0, %v568
        %v570 = vpop.f32.mrb[0].mxu0
        %571 = vmatprep.mubr.bf16.mxu0 0
        %572 = vmatmul.mubr.bf16.gmra.mrb[0].mxu0 %v446
        %v573 = vpop.f32.mrb[0].mxu0
        %v574 = vadd.f32 0.0, %v573
        %v575 = vpop.f32.mrb[0].mxu0
        %v576 = vpop.f32.mrb[0].mxu0
        %v577 = vadd.f32 0.0, %v576
        %v578 = vpop.f32.mrb[0].mxu0
        %579 = vmatprep.mubr.bf16.mxu0 0
        %580 = vmatmul.mubr.bf16.gmra.mrb[0].mxu0 %v447
        %v581 = vpop.f32.mrb[0].mxu0
        %v582 = vadd.f32 0.0, %v581
        %v583 = vpop.f32.mrb[0].mxu0
        %v584 = vpop.f32.mrb[0].mxu0
        %v585 = vadd.f32 0.0, %v584
        %v586 = vpop.f32.mrb[0].mxu0
        %587 = vmatprep.mubr.bf16.mxu0 0
        %588 = vmatmul.mubr.bf16.gmra.mrb[0].mxu0 %v448
        %v589 = vpop.f32.mrb[0].mxu0
        %v590 = vadd.f32 0.0, %v589
        %v591 = vpop.f32.mrb[0].mxu0
        %v592 = vpop.f32.mrb[0].mxu0
        %v593 = vadd.f32 0.0, %v592
        %v594 = vpop.f32.mrb[0].mxu0
        %595 = vmatprep.mubr.bf16.mxu0 0
        %596 = vmatmul.mubr.bf16.gmra.mrb[0].mxu0 %v449
        %v597 = vpop.f32.mrb[0].mxu0
        %v598 = vadd.f32 0.0, %v597
        %v599 = vpop.f32.mrb[0].mxu0
        %v600 = vpop.f32.mrb[0].mxu0
        %v601 = vadd.f32 0.0, %v600
        %v602 = vpop.f32.mrb[0].mxu0
        %603 = vmatprep.mubr.bf16.mxu0 0
        %604 = vmatmul.mubr.bf16.gmra.mrb[0].mxu0 %v450
        %v605 = vpop.f32.mrb[0].mxu0
        %v606 = vadd.f32 0.0, %v605
        %v607 = vpop.f32.mrb[0].mxu0
        %v608 = vpop.f32.mrb[0].mxu0
        %v609 = vadd.f32 0.0, %v608
        %v610 = vpop.f32.mrb[0].mxu0
        %611 = vdwg.mxu0
        %v612 = vpack.c.bf16 %v553, %v550
        %v613 = vpack.c.bf16 %v561, %v558
        %v614 = vpack.c.bf16 %v569, %v566
        %v615 = vpack.c.bf16 %v577, %v574
        %v616 = vpack.c.bf16 %v585, %v582
        %v617 = vpack.c.bf16 %v593, %v590
        %v618 = vpack.c.bf16 %v601, %v598
        %v619 = vpack.c.bf16 %v609, %v606
        %620 = vst [vmem:[#allocation3] sm:$0xff] %v612
        %621 = vst [vmem:[#allocation3 + $0x8] sm:$0xff] %v613
        %622 = vst [vmem:[#allocation3 + $0x10] sm:$0xff] %v614
        %623 = vst [vmem:[#allocation3 + $0x18] sm:$0xff] %v615
        %624 = vst [vmem:[#allocation3 + $0x20] sm:$0xff] %v616
        %625 = vst [vmem:[#allocation3 + $0x28] sm:$0xff] %v617
        %626 = vst [vmem:[#allocation3 + $0x30] sm:$0xff] %v618
        %627 = vst [vmem:[#allocation3 + $0x38] sm:$0xff] %v619
      $region60: #{net_forward.1} parent=51 // pred_fallthru
        _
      %s628 = smul.u32 %s24, 128
      %s629 = sshra.s32 %s628, 4
      %s630 = sand.u32 %s628, 15
      %s631 = smul.addr %s629, 8
      %s632 = scalar_lea.vmem [#allocation2], %s631
      %v633 = vld [vmem:[%s632] sm:$0xff]
      %v634 = vld [vmem:[%s632 + $0x8] sm:$0xff]
      %v635 = vld [vmem:[%s632 + $0x10] sm:$0xff]
      %v636 = vld [vmem:[%s632 + $0x18] sm:$0xff]
      %v637 = vld [vmem:[%s632 + $0x20] sm:$0xff]
      %v638 = vld [vmem:[%s632 + $0x28] sm:$0xff]
      %v639 = vld [vmem:[%s632 + $0x30] sm:$0xff]
      %v640 = vld [vmem:[%s632 + $0x38] sm:$0xff]
      %v641 = vld [vmem:[%s360] sm:$0xf]
      %v642 = vld [vmem:[%s360 + $0x8] sm:$0xf]
      %v643 = vld [vmem:[%s360 + $0x10] sm:$0xf]
      %v644 = vld [vmem:[%s360 + $0x18] sm:$0xf]
      %v645 = vld [vmem:[%s360 + $0x20] sm:$0xf]
      %v646 = vld [vmem:[%s360 + $0x28] sm:$0xf]
      %v647 = vld [vmem:[%s360 + $0x30] sm:$0xf]
      %v648 = vld [vmem:[%s360 + $0x38] sm:$0xf]
      %v649 = vld [vmem:[%s360 + $0x40] sm:$0xf]
      %v650 = vld [vmem:[%s360 + $0x48] sm:$0xf]
      %v651 = vld [vmem:[%s360 + $0x50] sm:$0xf]
      %v652 = vld [vmem:[%s360 + $0x58] sm:$0xf]
      %v653 = vld [vmem:[%s360 + $0x60] sm:$0xf]
      %v654 = vld [vmem:[%s360 + $0x68] sm:$0xf]
      %v655 = vld [vmem:[%s360 + $0x70] sm:$0xf]
      %v656 = vld [vmem:[%s360 + $0x78] sm:$0xf]
      %v657 = vld [vmem:[%s344] sm:$0xf]
      %v658 = vld [vmem:[%s344 + $0x4] sm:$0xf]
      %v659 = vld [vmem:[%s344 + $0x8] sm:$0xf]
      %v660 = vld [vmem:[%s344 + $0xc] sm:$0xf]
      %v661 = vld [vmem:[%s344 + $0x10] sm:$0xf]
      %v662 = vld [vmem:[%s344 + $0x14] sm:$0xf]
      %v663 = vld [vmem:[%s344 + $0x18] sm:$0xf]
      %v664 = vld [vmem:[%s344 + $0x1c] sm:$0xf]
      %v665 = vld [vmem:[%s344 + $0x20] sm:$0xf]
      %v666 = vld [vmem:[%s344 + $0x24] sm:$0xf]
      %v667 = vld [vmem:[%s344 + $0x28] sm:$0xf]
      %v668 = vld [vmem:[%s344 + $0x2c] sm:$0xf]
      %v669 = vld [vmem:[%s344 + $0x30] sm:$0xf]
      %v670 = vld [vmem:[%s344 + $0x34] sm:$0xf]
      %v671 = vld [vmem:[%s344 + $0x38] sm:$0xf]
      %v672 = vld [vmem:[%s344 + $0x3c] sm:$0xf]
      %v673 = vld [vmem:[#allocation3] sm:$0xff]
      %v674 = vld [vmem:[#allocation3 + $0x8] sm:$0xff]
      %v675 = vld [vmem:[#allocation3 + $0x10] sm:$0xff]
      %v676 = vld [vmem:[#allocation3 + $0x18] sm:$0xff]
      %v677 = vld [vmem:[#allocation3 + $0x20] sm:$0xff]
      %v678 = vld [vmem:[#allocation3 + $0x28] sm:$0xff]
      %v679 = vld [vmem:[#allocation3 + $0x30] sm:$0xff]
      %v680 = vld [vmem:[#allocation3 + $0x38] sm:$0xff]
      %v697 = vunpack.c.l.b16 %v657
      %v698 = vunpack.c.l.b16 %v658
      %v699 = vunpack.c.l.b16 %v659
      %v700 = vunpack.c.l.b16 %v660
      %v701 = vunpack.c.l.b16 %v661
      %v702 = vunpack.c.l.b16 %v662
      %v703 = vunpack.c.l.b16 %v663
      %v704 = vunpack.c.l.b16 %v664
      %v705 = vunpack.c.l.b16 %v665
      %v706 = vunpack.c.l.b16 %v666
      %v707 = vunpack.c.l.b16 %v667
      %v708 = vunpack.c.l.b16 %v668
      %v709 = vunpack.c.l.b16 %v669
      %v710 = vunpack.c.l.b16 %v670
      %v711 = vunpack.c.l.b16 %v671
      %v712 = vunpack.c.l.b16 %v672
      %v713 = vpack.c.b16 %v698, %v697
      %v714 = vpack.c.b16 %v700, %v699
      %v715 = vpack.c.b16 %v702, %v701
      %v716 = vpack.c.b16 %v704, %v703
      %v717 = vpack.c.b16 %v706, %v705
      %v718 = vpack.c.b16 %v708, %v707
      %v719 = vpack.c.b16 %v710, %v709
      %v720 = vpack.c.b16 %v712, %v711
      %729 = vmatprep.subr.bf16.mxu0 0
      %730 = vmatpush1.bf16.msra.mxu0 %v673
      %731 = vmatprep.subr.bf16.mxu0 0
      %732 = vmatpush1.bf16.msra.mxu0 %v674
      %733 = vmatprep.subr.bf16.mxu0 0
      %734 = vmatpush1.bf16.msra.mxu0 %v675
      %735 = vmatprep.subr.bf16.mxu0 0
      %736 = vmatpush1.bf16.msra.mxu0 %v676
      %737 = vmatprep.subr.bf16.mxu0 0
      %738 = vmatpush1.bf16.msra.mxu0 %v677
      %739 = vmatprep.subr.bf16.mxu0 0
      %740 = vmatpush1.bf16.msra.mxu0 %v678
      %741 = vmatprep.subr.bf16.mxu0 0
      %742 = vmatpush1.bf16.msra.mxu0 %v679
      %743 = vmatprep.subr.bf16.mxu0 0
      %744 = vmatpush1.bf16.msra.mxu0 %v680
      %745 = vmatprep.subr.bf16.mxu0 0
      %746 = vmatpush1.bf16.msra.mxu0 0
      %747 = vmatprep.subr.bf16.mxu0 0
      %748 = vmatpush1.bf16.msra.mxu0 0
      %749 = vmatprep.subr.bf16.mxu0 0
      %750 = vmatpush1.bf16.msra.mxu0 0
      %751 = vmatprep.subr.bf16.mxu0 0
      %752 = vmatpush1.bf16.msra.mxu0 0
      %753 = vmatprep.subr.bf16.mxu0 0
      %754 = vmatpush1.bf16.msra.mxu0 0
      %755 = vmatprep.subr.bf16.mxu0 0
      %756 = vmatpush1.bf16.msra.mxu0 0
      %757 = vmatprep.subr.bf16.mxu0 0
      %758 = vmatpush1.bf16.msra.mxu0 0
      %759 = vmatprep.subr.bf16.mxu0 0
      %760 = vmatpush1.bf16.msra.mxu0 0
      %761 = vmatprep.mubr.bf16.mxu0 0
      %762 = vmatmul.mubr.bf16.gmra.mrb[0].mxu0 %v713
      %v763 = vpop.f32.mrb[0].mxu0
      %v764 = vadd.f32 0.0, %v763
      %v765 = vpop.f32.mrb[0].mxu0
      %v766 = vpop.f32.mrb[0].mxu0
      %v767 = vadd.f32 0.0, %v766
      %v768 = vpop.f32.mrb[0].mxu0
      %769 = vmatprep.mubr.bf16.mxu0 0
      %770 = vmatmul.mubr.bf16.gmra.mrb[0].mxu0 %v714
      %v771 = vpop.f32.mrb[0].mxu0
      %v772 = vadd.f32 0.0, %v771
      %v773 = vpop.f32.mrb[0].mxu0
      %v774 = vpop.f32.mrb[0].mxu0
      %v775 = vadd.f32 0.0, %v774
      %v776 = vpop.f32.mrb[0].mxu0
      %777 = vmatprep.mubr.bf16.mxu0 0
      %778 = vmatmul.mubr.bf16.gmra.mrb[0].mxu0 %v715
      %v779 = vpop.f32.mrb[0].mxu0
      %v780 = vadd.f32 0.0, %v779
      %v781 = vpop.f32.mrb[0].mxu0
      %v782 = vpop.f32.mrb[0].mxu0
      %v783 = vadd.f32 0.0, %v782
      %v784 = vpop.f32.mrb[0].mxu0
      %785 = vmatprep.mubr.bf16.mxu0 0
      %786 = vmatmul.mubr.bf16.gmra.mrb[0].mxu0 %v716
      %v787 = vpop.f32.mrb[0].mxu0
      %v788 = vadd.f32 0.0, %v787
      %v789 = vpop.f32.mrb[0].mxu0
      %v790 = vpop.f32.mrb[0].mxu0
      %v791 = vadd.f32 0.0, %v790
      %v792 = vpop.f32.mrb[0].mxu0
      %793 = vmatprep.mubr.bf16.mxu0 0
      %794 = vmatmul.mubr.bf16.gmra.mrb[0].mxu0 %v717
      %v795 = vpop.f32.mrb[0].mxu0
      %v796 = vadd.f32 0.0, %v795
      %v797 = vpop.f32.mrb[0].mxu0
      %v798 = vpop.f32.mrb[0].mxu0
      %v799 = vadd.f32 0.0, %v798
      %v800 = vpop.f32.mrb[0].mxu0
      %801 = vmatprep.mubr.bf16.mxu0 0
      %802 = vmatmul.mubr.bf16.gmra.mrb[0].mxu0 %v718
      %v803 = vpop.f32.mrb[0].mxu0
      %v804 = vadd.f32 0.0, %v803
      %v805 = vpop.f32.mrb[0].mxu0
      %v806 = vpop.f32.mrb[0].mxu0
      %v807 = vadd.f32 0.0, %v806
      %v808 = vpop.f32.mrb[0].mxu0
      %809 = vmatprep.mubr.bf16.mxu0 0
      %810 = vmatmul.mubr.bf16.gmra.mrb[0].mxu0 %v719
      %v811 = vpop.f32.mrb[0].mxu0
      %v812 = vadd.f32 0.0, %v811
      %v813 = vpop.f32.mrb[0].mxu0
      %v814 = vpop.f32.mrb[0].mxu0
      %v815 = vadd.f32 0.0, %v814
      %v816 = vpop.f32.mrb[0].mxu0
      %817 = vmatprep.mubr.bf16.mxu0 0
      %818 = vmatmul.mubr.bf16.gmra.mrb[0].mxu0 %v720
      %v819 = vpop.f32.mrb[0].mxu0
      %v820 = vadd.f32 0.0, %v819
      %v821 = vpop.f32.mrb[0].mxu0
      %v822 = vpop.f32.mrb[0].mxu0
      %v823 = vadd.f32 0.0, %v822
      %v824 = vpop.f32.mrb[0].mxu0
      %825 = vdwg.mxu0
      %v842 = vunpack.c.l.b16 %v641
      %v843 = vunpack.c.l.b16 %v642
      %v844 = vunpack.c.l.b16 %v643
      %v845 = vunpack.c.l.b16 %v644
      %v846 = vunpack.c.l.b16 %v645
      %v847 = vunpack.c.l.b16 %v646
      %v848 = vunpack.c.l.b16 %v647
      %v849 = vunpack.c.l.b16 %v648
      %v850 = vunpack.c.l.b16 %v649
      %v851 = vunpack.c.l.b16 %v650
      %v852 = vunpack.c.l.b16 %v651
      %v853 = vunpack.c.l.b16 %v652
      %v854 = vunpack.c.l.b16 %v653
      %v855 = vunpack.c.l.b16 %v654
      %v856 = vunpack.c.l.b16 %v655
      %v857 = vunpack.c.l.b16 %v656
      %v858 = vpack.c.b16 %v843, %v842
      %v859 = vpack.c.b16 %v845, %v844
      %v860 = vpack.c.b16 %v847, %v846
      %v861 = vpack.c.b16 %v849, %v848
      %v862 = vpack.c.b16 %v851, %v850
      %v863 = vpack.c.b16 %v853, %v852
      %v864 = vpack.c.b16 %v855, %v854
      %v865 = vpack.c.b16 %v857, %v856
      %874 = vmatprep.subr.bf16.mxu0 0
      %875 = vmatpush1.bf16.msra.mxu0 %v858
      %876 = vmatprep.subr.bf16.mxu0 0
      %877 = vmatpush1.bf16.msra.mxu0 %v859
      %878 = vmatprep.subr.bf16.mxu0 0
      %879 = vmatpush1.bf16.msra.mxu0 %v860
      %880 = vmatprep.subr.bf16.mxu0 0
      %881 = vmatpush1.bf16.msra.mxu0 %v861
      %882 = vmatprep.subr.bf16.mxu0 0
      %883 = vmatpush1.bf16.msra.mxu0 %v862
      %884 = vmatprep.subr.bf16.mxu0 0
      %885 = vmatpush1.bf16.msra.mxu0 %v863
      %886 = vmatprep.subr.bf16.mxu0 0
      %887 = vmatpush1.bf16.msra.mxu0 %v864
      %888 = vmatprep.subr.bf16.mxu0 0
      %889 = vmatpush1.bf16.msra.mxu0 %v865
      %890 = vmatprep.subr.bf16.mxu0 0
      %891 = vmatpush1.bf16.msra.mxu0 0
      %892 = vmatprep.subr.bf16.mxu0 0
      %893 = vmatpush1.bf16.msra.mxu0 0
      %894 = vmatprep.subr.bf16.mxu0 0
      %895 = vmatpush1.bf16.msra.mxu0 0
      %896 = vmatprep.subr.bf16.mxu0 0
      %897 = vmatpush1.bf16.msra.mxu0 0
      %898 = vmatprep.subr.bf16.mxu0 0
      %899 = vmatpush1.bf16.msra.mxu0 0
      %900 = vmatprep.subr.bf16.mxu0 0
      %901 = vmatpush1.bf16.msra.mxu0 0
      %902 = vmatprep.subr.bf16.mxu0 0
      %903 = vmatpush1.bf16.msra.mxu0 0
      %904 = vmatprep.subr.bf16.mxu0 0
      %905 = vmatpush1.bf16.msra.mxu0 0
      %906 = vmatprep.mubr.bf16.mxu0 0
      %907 = vmatmul.mubr.bf16.gmra.mrb[0].mxu0 %v633
      %v908 = vpop.f32.mrb[0].mxu0
      %v909 = vadd.f32 %v764, %v908
      %v910 = vpop.f32.mrb[0].mxu0
      %v911 = vpop.f32.mrb[0].mxu0
      %v912 = vadd.f32 %v767, %v911
      %v913 = vpop.f32.mrb[0].mxu0
      %914 = vmatprep.mubr.bf16.mxu0 0
      %915 = vmatmul.mubr.bf16.gmra.mrb[0].mxu0 %v634
      %v916 = vpop.f32.mrb[0].mxu0
      %v917 = vadd.f32 %v772, %v916
      %v918 = vpop.f32.mrb[0].mxu0
      %v919 = vpop.f32.mrb[0].mxu0
      %v920 = vadd.f32 %v775, %v919
      %v921 = vpop.f32.mrb[0].mxu0
      %922 = vmatprep.mubr.bf16.mxu0 0
      %923 = vmatmul.mubr.bf16.gmra.mrb[0].mxu0 %v635
      %v924 = vpop.f32.mrb[0].mxu0
      %v925 = vadd.f32 %v780, %v924
      %v926 = vpop.f32.mrb[0].mxu0
      %v927 = vpop.f32.mrb[0].mxu0
      %v928 = vadd.f32 %v783, %v927
      %v929 = vpop.f32.mrb[0].mxu0
      %930 = vmatprep.mubr.bf16.mxu0 0
      %931 = vmatmul.mubr.bf16.gmra.mrb[0].mxu0 %v636
      %v932 = vpop.f32.mrb[0].mxu0
      %v933 = vadd.f32 %v788, %v932
      %v934 = vpop.f32.mrb[0].mxu0
      %v935 = vpop.f32.mrb[0].mxu0
      %v936 = vadd.f32 %v791, %v935
      %v937 = vpop.f32.mrb[0].mxu0
      %938 = vmatprep.mubr.bf16.mxu0 0
      %939 = vmatmul.mubr.bf16.gmra.mrb[0].mxu0 %v637
      %v940 = vpop.f32.mrb[0].mxu0
      %v941 = vadd.f32 %v796, %v940
      %v942 = vpop.f32.mrb[0].mxu0
      %v943 = vpop.f32.mrb[0].mxu0
      %v944 = vadd.f32 %v799, %v943
      %v945 = vpop.f32.mrb[0].mxu0
      %946 = vmatprep.mubr.bf16.mxu0 0
      %947 = vmatmul.mubr.bf16.gmra.mrb[0].mxu0 %v638
      %v948 = vpop.f32.mrb[0].mxu0
      %v949 = vadd.f32 %v804, %v948
      %v950 = vpop.f32.mrb[0].mxu0
      %v951 = vpop.f32.mrb[0].mxu0
      %v952 = vadd.f32 %v807, %v951
      %v953 = vpop.f32.mrb[0].mxu0
      %954 = vmatprep.mubr.bf16.mxu0 0
      %955 = vmatmul.mubr.bf16.gmra.mrb[0].mxu0 %v639
      %v956 = vpop.f32.mrb[0].mxu0
      %v957 = vadd.f32 %v812, %v956
      %v958 = vpop.f32.mrb[0].mxu0
      %v959 = vpop.f32.mrb[0].mxu0
      %v960 = vadd.f32 %v815, %v959
      %v961 = vpop.f32.mrb[0].mxu0
      %962 = vmatprep.mubr.bf16.mxu0 0
      %963 = vmatmul.mubr.bf16.gmra.mrb[0].mxu0 %v640
      %v964 = vpop.f32.mrb[0].mxu0
      %v965 = vadd.f32 %v820, %v964
      %v966 = vpop.f32.mrb[0].mxu0
      %v967 = vpop.f32.mrb[0].mxu0
      %v968 = vadd.f32 %v823, %v967
      %v969 = vpop.f32.mrb[0].mxu0
      %970 = vdwg.mxu0
      %v971 = vld [vmem:[%s354] sm:$0xff]
      %v972 = vld [vmem:[%s354 + $0x8] sm:$0xff]
      %v973 = vld [vmem:[%s354 + $0x10] sm:$0xff]
      %v974 = vld [vmem:[%s354 + $0x18] sm:$0xff]
      %v975 = vld [vmem:[%s354 + $0x20] sm:$0xff]
      %v976 = vld [vmem:[%s354 + $0x28] sm:$0xff]
      %v977 = vld [vmem:[%s354 + $0x30] sm:$0xff]
      %v978 = vld [vmem:[%s354 + $0x38] sm:$0xff]
      %v979 = vld [vmem:[%s354 + $0x40] sm:$0xff]
      %v980 = vld [vmem:[%s354 + $0x48] sm:$0xff]
      %v981 = vld [vmem:[%s354 + $0x50] sm:$0xff]
      %v982 = vld [vmem:[%s354 + $0x58] sm:$0xff]
      %v983 = vld [vmem:[%s354 + $0x60] sm:$0xff]
      %v984 = vld [vmem:[%s354 + $0x68] sm:$0xff]
      %v985 = vld [vmem:[%s354 + $0x70] sm:$0xff]
      %v986 = vld [vmem:[%s354 + $0x78] sm:$0xff]
      %v987 = vadd.f32 %v909, %v971
      %v988 = vadd.f32 %v912, %v972
      %v989 = vadd.f32 %v917, %v973
      %v990 = vadd.f32 %v920, %v974
      %v991 = vadd.f32 %v925, %v975
      %v992 = vadd.f32 %v928, %v976
      %v993 = vadd.f32 %v933, %v977
      %v994 = vadd.f32 %v936, %v978
      %v995 = vadd.f32 %v941, %v979
      %v996 = vadd.f32 %v944, %v980
      %v997 = vadd.f32 %v949, %v981
      %v998 = vadd.f32 %v952, %v982
      %v999 = vadd.f32 %v957, %v983
      %v1000 = vadd.f32 %v960, %v984
      %v1001 = vadd.f32 %v965, %v985
      %v1002 = vadd.f32 %v968, %v986
      %v1003 = vmax.f32 %v987, 0.0
      %v1004 = vmax.f32 %v988, 0.0
      %v1005 = vmax.f32 %v989, 0.0
      %v1006 = vmax.f32 %v990, 0.0
      %v1007 = vmax.f32 %v991, 0.0
      %v1008 = vmax.f32 %v992, 0.0
      %v1009 = vmax.f32 %v993, 0.0
      %v1010 = vmax.f32 %v994, 0.0
      %v1011 = vmax.f32 %v995, 0.0
      %v1012 = vmax.f32 %v996, 0.0
      %v1013 = vmax.f32 %v997, 0.0
      %v1014 = vmax.f32 %v998, 0.0
      %v1015 = vmax.f32 %v999, 0.0
      %v1016 = vmax.f32 %v1000, 0.0
      %v1017 = vmax.f32 %v1001, 0.0
      %v1018 = vmax.f32 %v1002, 0.0
      %v1019 = vpack.c.bf16 %v1004, %v1003
      %v1020 = vpack.c.bf16 %v1006, %v1005
      %v1021 = vpack.c.bf16 %v1008, %v1007
      %v1022 = vpack.c.bf16 %v1010, %v1009
      %v1023 = vpack.c.bf16 %v1012, %v1011
      %v1024 = vpack.c.bf16 %v1014, %v1013
      %v1025 = vpack.c.bf16 %v1016, %v1015
      %v1026 = vpack.c.bf16 %v1018, %v1017
      %1027 = vst [vmem:[%s632] sm:$0xff] %v1019
      %1028 = vst [vmem:[%s632 + $0x8] sm:$0xff] %v1020
      %1029 = vst [vmem:[%s632 + $0x10] sm:$0xff] %v1021
      %1030 = vst [vmem:[%s632 + $0x18] sm:$0xff] %v1022
      %1031 = vst [vmem:[%s632 + $0x20] sm:$0xff] %v1023
      %1032 = vst [vmem:[%s632 + $0x28] sm:$0xff] %v1024
      %1033 = vst [vmem:[%s632 + $0x30] sm:$0xff] %v1025
      %1034 = vst [vmem:[%s632 + $0x38] sm:$0xff] %v1026
      %p1035 = scmp.eq.s32.totalorder %s23, 1
      %p1036 = pnand %p1035, %p363
      %p1037 = pneg %p1036
      // Predicated region
      $region61: #{net_forward.1} parent=51 // pred_check
        _
      $region62: #{net_forward.1} parent=51 // pred_check_branch
        %1039 = sbr.rel (%p1036) target = $region64
      $region63: #{net_forward.1} parent=51 // pred_region
        %v1040 = vld [vmem:[%s4] sm:$0xf]
        %v1041 = vld [vmem:[#allocation2] sm:$0xff]
        %v1042 = vld [vmem:[#allocation2 + $0x8] sm:$0xff]
        %v1043 = vld [vmem:[#allocation2 + $0x10] sm:$0xff]
        %v1044 = vld [vmem:[#allocation2 + $0x18] sm:$0xff]
        %v1045 = vld [vmem:[#allocation2 + $0x20] sm:$0xff]
        %v1046 = vld [vmem:[#allocation2 + $0x28] sm:$0xff]
        %v1047 = vld [vmem:[#allocation2 + $0x30] sm:$0xff]
        %v1048 = vld [vmem:[#allocation2 + $0x38] sm:$0xff]
        %1049 = vmatprep.subr.bf16.mxu0 0
        %1050 = vmatpush1.bf16.msra.mxu0 %v1041
        %1051 = vmatprep.subr.bf16.mxu0 0
        %1052 = vmatpush1.bf16.msra.mxu0 %v1042
        %1053 = vmatprep.subr.bf16.mxu0 0
        %1054 = vmatpush1.bf16.msra.mxu0 %v1043
        %1055 = vmatprep.subr.bf16.mxu0 0
        %1056 = vmatpush1.bf16.msra.mxu0 %v1044
        %1057 = vmatprep.subr.bf16.mxu0 0
        %1058 = vmatpush1.bf16.msra.mxu0 %v1045
        %1059 = vmatprep.subr.bf16.mxu0 0
        %1060 = vmatpush1.bf16.msra.mxu0 %v1046
        %1061 = vmatprep.subr.bf16.mxu0 0
        %1062 = vmatpush1.bf16.msra.mxu0 %v1047
        %1063 = vmatprep.subr.bf16.mxu0 0
        %1064 = vmatpush1.bf16.msra.mxu0 %v1048
        %1065 = vmatprep.subr.bf16.mxu0 0
        %1066 = vmatpush1.bf16.msra.mxu0 0
        %1067 = vmatprep.subr.bf16.mxu0 0
        %1068 = vmatpush1.bf16.msra.mxu0 0
        %1069 = vmatprep.subr.bf16.mxu0 0
        %1070 = vmatpush1.bf16.msra.mxu0 0
        %1071 = vmatprep.subr.bf16.mxu0 0
        %1072 = vmatpush1.bf16.msra.mxu0 0
        %1073 = vmatprep.subr.bf16.mxu0 0
        %1074 = vmatpush1.bf16.msra.mxu0 0
        %1075 = vmatprep.subr.bf16.mxu0 0
        %1076 = vmatpush1.bf16.msra.mxu0 0
        %1077 = vmatprep.subr.bf16.mxu0 0
        %1078 = vmatpush1.bf16.msra.mxu0 0
        %1079 = vmatprep.subr.bf16.mxu0 0
        %1080 = vmatpush1.bf16.msra.mxu0 0
        %1081 = vmatprep.mubr.bf16.mxu0 0
        %1082 = vmatmul.mubr.bf16.gmra.mrb[0].mxu0 %v1040
        %v1083 = vpop.f32.mrb[0].mxu0
        %v1084 = vadd.f32 0.0, %v1083
        %v1085 = vpop.f32.mrb[0].mxu0
        %v1086 = vpop.f32.mrb[0].mxu0
        %v1087 = vpop.f32.mrb[0].mxu0
        %1088 = vdwg.mxu0
        %v1089 = vpack.c.bf16 %v1084, %v1084
        %v1090 = vld [vmem:[%s5] sm:$0xf]
        %v1091 = vld [vmem:[%s5 + $0x4] sm:$0xf]
        %v1092 = vld [vmem:[%s5 + $0x8] sm:$0xf]
        %v1093 = vld [vmem:[%s5 + $0xc] sm:$0xf]
        %v1094 = vld [vmem:[%s5 + $0x10] sm:$0xf]
        %v1095 = vld [vmem:[%s5 + $0x14] sm:$0xf]
        %v1096 = vld [vmem:[%s5 + $0x18] sm:$0xf]
        %v1097 = vld [vmem:[%s5 + $0x1c] sm:$0xf]
        %v1098 = vld [vmem:[%s5 + $0x20] sm:$0xf]
        %v1099 = vld [vmem:[%s5 + $0x24] sm:$0xf]
        %v1100 = vld [vmem:[%s5 + $0x28] sm:$0xf]
        %v1101 = vld [vmem:[%s5 + $0x2c] sm:$0xf]
        %v1102 = vld [vmem:[%s5 + $0x30] sm:$0xf]
        %v1103 = vld [vmem:[%s5 + $0x34] sm:$0xf]
        %v1104 = vld [vmem:[%s5 + $0x38] sm:$0xf]
        %v1105 = vld [vmem:[%s5 + $0x3c] sm:$0xf]
        %v1106 = vld [vmem:[%s7] sm:$0x1]
        %v1107 = vlaneseq
        %v1108 = vshrl.u32 %v1107, 7
        %v1109 = vsub.s32 0, %v1108
        %v1110 = vrot.slane %v1106, %v1109
        %v1127 = vunpack.c.l.b16 %v1090
        %v1128 = vunpack.c.l.b16 %v1091
        %v1129 = vunpack.c.l.b16 %v1092
        %v1130 = vunpack.c.l.b16 %v1093
        %v1131 = vunpack.c.l.b16 %v1094
        %v1132 = vunpack.c.l.b16 %v1095
        %v1133 = vunpack.c.l.b16 %v1096
        %v1134 = vunpack.c.l.b16 %v1097
        %v1135 = vunpack.c.l.b16 %v1098
        %v1136 = vunpack.c.l.b16 %v1099
        %v1137 = vunpack.c.l.b16 %v1100
        %v1138 = vunpack.c.l.b16 %v1101
        %v1139 = vunpack.c.l.b16 %v1102
        %v1140 = vunpack.c.l.b16 %v1103
        %v1141 = vunpack.c.l.b16 %v1104
        %v1142 = vunpack.c.l.b16 %v1105
        %v1143 = vpack.c.b16 %v1128, %v1127
        %v1144 = vpack.c.b16 %v1130, %v1129
        %v1145 = vpack.c.b16 %v1132, %v1131
        %v1146 = vpack.c.b16 %v1134, %v1133
        %v1147 = vpack.c.b16 %v1136, %v1135
        %v1148 = vpack.c.b16 %v1138, %v1137
        %v1149 = vpack.c.b16 %v1140, %v1139
        %v1150 = vpack.c.b16 %v1142, %v1141
        %1159 = vmatprep.subr.bf16.mxu0 0
        %1160 = vmatpush1.bf16.msra.mxu0 %v1143
        %1161 = vmatprep.subr.bf16.mxu0 0
        %1162 = vmatpush1.bf16.msra.mxu0 %v1144
        %1163 = vmatprep.subr.bf16.mxu0 0
        %1164 = vmatpush1.bf16.msra.mxu0 %v1145
        %1165 = vmatprep.subr.bf16.mxu0 0
        %1166 = vmatpush1.bf16.msra.mxu0 %v1146
        %1167 = vmatprep.subr.bf16.mxu0 0
        %1168 = vmatpush1.bf16.msra.mxu0 %v1147
        %1169 = vmatprep.subr.bf16.mxu0 0
        %1170 = vmatpush1.bf16.msra.mxu0 %v1148
        %1171 = vmatprep.subr.bf16.mxu0 0
        %1172 = vmatpush1.bf16.msra.mxu0 %v1149
        %1173 = vmatprep.subr.bf16.mxu0 0
        %1174 = vmatpush1.bf16.msra.mxu0 %v1150
        %1175 = vmatprep.subr.bf16.mxu0 0
        %1176 = vmatpush1.bf16.msra.mxu0 0
        %1177 = vmatprep.subr.bf16.mxu0 0
        %1178 = vmatpush1.bf16.msra.mxu0 0
        %1179 = vmatprep.subr.bf16.mxu0 0
        %1180 = vmatpush1.bf16.msra.mxu0 0
        %1181 = vmatprep.subr.bf16.mxu0 0
        %1182 = vmatpush1.bf16.msra.mxu0 0
        %1183 = vmatprep.subr.bf16.mxu0 0
        %1184 = vmatpush1.bf16.msra.mxu0 0
        %1185 = vmatprep.subr.bf16.mxu0 0
        %1186 = vmatpush1.bf16.msra.mxu0 0
        %1187 = vmatprep.subr.bf16.mxu0 0
        %1188 = vmatpush1.bf16.msra.mxu0 0
        %1189 = vmatprep.subr.bf16.mxu0 0
        %1190 = vmatpush1.bf16.msra.mxu0 0
        %1191 = vmatprep.mubr.bf16.mxu0 0
        %1192 = vmatmul.mubr.bf16.gmra.mrb[0].mxu0 %v1089
        %v1193 = vpop.f32.mrb[0].mxu0
        %v1194 = vadd.f32 %v1110, %v1193
        %v1195 = vpop.f32.mrb[0].mxu0
        %v1196 = vpop.f32.mrb[0].mxu0
        %v1197 = vpop.f32.mrb[0].mxu0
        %1198 = vdwg.mxu0
        %v1199 = vmax.f32 %v1194, 0.0
        %v1200 = vpack.c.bf16 %v1199, %v1199
        %v1201 = vld [vmem:[%s6] sm:$0xf]
        %v1202 = vld [vmem:[%s6 + $0x4] sm:$0xf]
        %v1203 = vld [vmem:[%s6 + $0x8] sm:$0xf]
        %v1204 = vld [vmem:[%s6 + $0xc] sm:$0xf]
        %v1205 = vld [vmem:[%s6 + $0x10] sm:$0xf]
        %v1206 = vld [vmem:[%s6 + $0x14] sm:$0xf]
        %v1207 = vld [vmem:[%s6 + $0x18] sm:$0xf]
        %v1208 = vld [vmem:[%s6 + $0x1c] sm:$0xf]
        %v1209 = vld [vmem:[%s6 + $0x20] sm:$0xf]
        %v1210 = vld [vmem:[%s6 + $0x24] sm:$0xf]
        %v1211 = vld [vmem:[%s6 + $0x28] sm:$0xf]
        %v1212 = vld [vmem:[%s6 + $0x2c] sm:$0xf]
        %v1213 = vld [vmem:[%s6 + $0x30] sm:$0xf]
        %v1214 = vld [vmem:[%s6 + $0x34] sm:$0xf]
        %v1215 = vld [vmem:[%s6 + $0x38] sm:$0xf]
        %v1216 = vld [vmem:[%s6 + $0x3c] sm:$0xf]
        %v1217 = vld [vmem:[%s7 + $0x1] sm:$0x1]
        %v1218 = vlaneseq
        %v1219 = vshrl.u32 %v1218, 7
        %v1220 = vsub.s32 0, %v1219
        %v1221 = vrot.slane %v1217, %v1220
        %v1238 = vunpack.c.l.b16 %v1201
        %v1239 = vunpack.c.l.b16 %v1202
        %v1240 = vunpack.c.l.b16 %v1203
        %v1241 = vunpack.c.l.b16 %v1204
        %v1242 = vunpack.c.l.b16 %v1205
        %v1243 = vunpack.c.l.b16 %v1206
        %v1244 = vunpack.c.l.b16 %v1207
        %v1245 = vunpack.c.l.b16 %v1208
        %v1246 = vunpack.c.l.b16 %v1209
        %v1247 = vunpack.c.l.b16 %v1210
        %v1248 = vunpack.c.l.b16 %v1211
        %v1249 = vunpack.c.l.b16 %v1212
        %v1250 = vunpack.c.l.b16 %v1213
        %v1251 = vunpack.c.l.b16 %v1214
        %v1252 = vunpack.c.l.b16 %v1215
        %v1253 = vunpack.c.l.b16 %v1216
        %v1254 = vpack.c.b16 %v1239, %v1238
        %v1255 = vpack.c.b16 %v1241, %v1240
        %v1256 = vpack.c.b16 %v1243, %v1242
        %v1257 = vpack.c.b16 %v1245, %v1244
        %v1258 = vpack.c.b16 %v1247, %v1246
        %v1259 = vpack.c.b16 %v1249, %v1248
        %v1260 = vpack.c.b16 %v1251, %v1250
        %v1261 = vpack.c.b16 %v1253, %v1252
        %1270 = vmatprep.subr.bf16.mxu0 0
        %1271 = vmatpush1.bf16.msra.mxu0 %v1254
        %1272 = vmatprep.subr.bf16.mxu0 0
        %1273 = vmatpush1.bf16.msra.mxu0 %v1255
        %1274 = vmatprep.subr.bf16.mxu0 0
        %1275 = vmatpush1.bf16.msra.mxu0 %v1256
        %1276 = vmatprep.subr.bf16.mxu0 0
        %1277 = vmatpush1.bf16.msra.mxu0 %v1257
        %1278 = vmatprep.subr.bf16.mxu0 0
        %1279 = vmatpush1.bf16.msra.mxu0 %v1258
        %1280 = vmatprep.subr.bf16.mxu0 0
        %1281 = vmatpush1.bf16.msra.mxu0 %v1259
        %1282 = vmatprep.subr.bf16.mxu0 0
        %1283 = vmatpush1.bf16.msra.mxu0 %v1260
        %1284 = vmatprep.subr.bf16.mxu0 0
        %1285 = vmatpush1.bf16.msra.mxu0 %v1261
        %1286 = vmatprep.subr.bf16.mxu0 0
        %1287 = vmatpush1.bf16.msra.mxu0 0
        %1288 = vmatprep.subr.bf16.mxu0 0
        %1289 = vmatpush1.bf16.msra.mxu0 0
        %1290 = vmatprep.subr.bf16.mxu0 0
        %1291 = vmatpush1.bf16.msra.mxu0 0
        %1292 = vmatprep.subr.bf16.mxu0 0
        %1293 = vmatpush1.bf16.msra.mxu0 0
        %1294 = vmatprep.subr.bf16.mxu0 0
        %1295 = vmatpush1.bf16.msra.mxu0 0
        %1296 = vmatprep.subr.bf16.mxu0 0
        %1297 = vmatpush1.bf16.msra.mxu0 0
        %1298 = vmatprep.subr.bf16.mxu0 0
        %1299 = vmatpush1.bf16.msra.mxu0 0
        %1300 = vmatprep.subr.bf16.mxu0 0
        %1301 = vmatpush1.bf16.msra.mxu0 0
        %1302 = vmatprep.mubr.bf16.mxu0 0
        %1303 = vmatmul.mubr.bf16.gmra.mrb[0].mxu0 %v1200
        %v1304 = vpop.f32.mrb[0].mxu0
        %v1305 = vadd.f32 %v1221, %v1304
        %v1306 = vpop.f32.mrb[0].mxu0
        %v1307 = vpop.f32.mrb[0].mxu0
        %v1308 = vpop.f32.mrb[0].mxu0
        %1309 = vdwg.mxu0
        %1310 = vst [vmem:[%s8] sm:$0xff] %v1305
      $region64: #{net_forward.1} parent=51 // pred_fallthru
        _
      // Predicated region
      $region65: #{net_forward.1} parent=51 // pred_check
        %p1311 = pneg %p229
      $region66: #{net_forward.1} parent=51 // pred_check_branch
        %1313 = sbr.rel (%p1311) target = $region68
      $region67: #{net_forward.1} parent=51 // pred_region
        _
      $region68: #{net_forward.1} parent=51 // pred_fallthru
        _
      // Predicated region
      $region69: #{net_forward.1} parent=51 // pred_check
        %p1314 = pneg %p229
      $region70: #{net_forward.1} parent=51 // pred_check_branch
        %1316 = sbr.rel (%p1314) target = $region72
      $region71: #{net_forward.1} parent=51 // pred_region
        _
      $region72: #{net_forward.1} parent=51 // pred_fallthru
        _
    $region52: #{net_forward.1} parent=5 // pred_fallthru
      _
    %p1317 = scmp.le.s32.totalorder 2, %s14
    // Predicated region
    $region73: #{net_forward.1} parent=5 // pred_check
      %p1318 = pneg %p1317
    $region74: #{net_forward.1} parent=5 // pred_check_branch
      %1320 = sbr.rel (%p1318) target = $region76
    $region75: #{net_forward.1} parent=5 // pred_region
      %s1321 = ssub.s32 %s14, 2
    $region76: #{net_forward.1} parent=5 // pred_fallthru
      _
  $region6: #{net_forward.1} parent=0 // loop_footer
    %s18 = sadd.s32 1, %s14
  $region7: #{net_forward.1} parent=0 // loop_footer_branch
    %13 = sbr.rel target = $region3
  $region8: #{net_forward.1} parent=0 // loop_exit
    _

</llo_original>
